<compile_context>
chip_gen: v7x
topology: tpu7x:2x2x1
jax: 0.10.0
libtpu: 0.0.40
codegen_flags: <defaults>
</compile_context>

<pallas_src>
import numpy as np
import jax
import jax.numpy as jnp
from jax import lax
from jax.experimental import pallas as pl
from jax.experimental.pallas import tpu as pltpu

# ----------------------------- model config ---------------------------------
B = 2
C, H, W = 4, 16, 16                 # input_shape = (C, H, W)
N_PATCHES = 4                       # H % N_PATCHES == 0, W % N_PATCHES == 0
P2 = N_PATCHES ** 2                 # 16 patch tokens
PATCH_H, PATCH_W = H // N_PATCHES, W // N_PATCHES
INPUT_D = C * PATCH_H * PATCH_W     # 64
HIDDEN_D = 32
N_HEADS = 2
D_HEAD = HIDDEN_D // N_HEADS        # 16
OUT_D = 10
SEQ = P2 + 1                        # 17 (class token + patches)
TOT = B * SEQ                       # 34 stacked rows (both samples)
EPS = 1e-5                          # torch.nn.LayerNorm default eps
LANE = 128                          # lane width for padded slab / output


# ------------------------- positional embeddings ----------------------------
def get_positional_embeddings(sequence_length, d):
    pos = np.ones((sequence_length, d), dtype=np.float32)
    for i in range(sequence_length):
        for j in range(d):
            if j % 2 == 0:
                pos[i, j] = np.sin(i / 10000 ** (j / d))
            else:
                pos[i, j] = np.cos(i / 10000 ** ((j - 1) / d))
    return jnp.asarray(pos)


# --------------------------- parameter slab layout ---------------------------
# Everything packs into one (SLAB_ROWS, 128) f32 slab; every entry starts on an
# 8-row (sublane-tile) boundary so in-kernel slices are aligned.
_PACK_SHAPES = [
    ("wmap", (INPUT_D, HIDDEN_D)),            # patch mapper weight
    ("posb", (TOT, HIDDEN_D)),                # pos-emb (+mapper bias, +cls row), tiled xB
    ("g1", (TOT, HIDDEN_D)), ("b1", (TOT, HIDDEN_D)),
    ("g2", (TOT, HIDDEN_D)), ("b2", (TOT, HIDDEN_D)),
    ("wqkv", (HIDDEN_D, 3 * HIDDEN_D)),       # block-diagonal fused QKV
    ("bqkv", (1, 3 * HIDDEN_D)),
    ("wenc", (HIDDEN_D, HIDDEN_D)), ("benc", (1, HIDDEN_D)),
    ("wmlp", (HIDDEN_D, LANE)),               # lane-padded head weight
    ("bmlp", (1, LANE)),                      # lane-padded head bias (-1e30 pad)
]
PACK_LAYOUT = {}
_off = 0
for _name, _shape in _PACK_SHAPES:
    PACK_LAYOUT[_name] = (_off, _shape)
    _off += -(-_shape[0] // 8) * 8            # align each entry to 8 rows
SLAB_ROWS = _off                              # multiple of 8


def pack_params(params):
    """Fuse + pad + pack all parameters into a single (SLAB_ROWS, 128) slab."""
    def blkdiag(w):                           # (H, dh, dh) -> (HIDDEN, HIDDEN)
        rows = []
        for h in range(N_HEADS):
            row = [w[h] if g == h else jnp.zeros((D_HEAD, D_HEAD), jnp.float32)
                   for g in range(N_HEADS)]
            rows.append(jnp.concatenate(row, axis=1))
        return jnp.concatenate(rows, axis=0)

    wqkv = jnp.concatenate(
        [blkdiag(params["wq"]), blkdiag(params["wk"]), blkdiag(params["wv"])],
        axis=1)                                                      # (32, 96)
    bqkv = jnp.concatenate(
        [params["bq"].reshape(1, HIDDEN_D),
         params["bk"].reshape(1, HIDDEN_D),
         params["bv"].reshape(1, HIDDEN_D)], axis=1)                 # (1, 96)

    # Mapper bias folded into the positional bias; the class token replaces
    # the bias on each sample's cls row (cls input rows are zero, so the
    # patch matmul contributes exactly 0 there).
    posb_one = params["pos"] + params["bmap"]                        # (17, 32)
    posb_one = posb_one.at[0].set(params["pos"][0] + params["cls"][0])
    posb = jnp.tile(posb_one, (B, 1))                                # (34, 32)

    wmlp_p = jnp.zeros((HIDDEN_D, LANE), jnp.float32).at[:, :OUT_D].set(params["wmlp"])
    bmlp_p = jnp.full((1, LANE), -1e30, jnp.float32).at[:, :OUT_D].set(params["bmlp"])

    entries = dict(
        wmap=params["wmap"], posb=posb,
        g1=jnp.tile(params["g1"], (B, 1)), b1=jnp.tile(params["b1"], (B, 1)),
        g2=jnp.tile(params["g2"], (B, 1)), b2=jnp.tile(params["b2"], (B, 1)),
        wqkv=wqkv, bqkv=bqkv,
        wenc=params["wenc"], benc=params["benc"],
        wmlp=wmlp_p, bmlp=bmlp_p)

    slab = jnp.zeros((SLAB_ROWS, LANE), jnp.float32)
    for name, arr in entries.items():
        r0, (r, c) = PACK_LAYOUT[name]
        assert arr.shape == (r, c), (name, arr.shape, (r, c))
        slab = slab.at[r0:r0 + r, :c].set(arr)
    return slab


# ------------------------------ Pallas kernel --------------------------------
def vit_kernel(x_ref, w_ref, out_ref):
    f32 = jnp.float32
    bf16 = jnp.bfloat16

    def pv(name):                             # static, 8-row-aligned slab view
        r0, (r, c) = PACK_LAYOUT[name]
        return w_ref[r0:r0 + r, 0:c]

    # single-pass bf16 MXU matmuls with f32 accumulation
    def mm(a, b):                             # a @ b
        return lax.dot_general(a.astype(bf16), b.astype(bf16),
                               (((1,), (0,)), ((), ())),
                               preferred_element_type=f32)

    def mm_nt(a, b):                          # a @ b.T  (no materialized transpose)
        return lax.dot_general(a.astype(bf16), b.astype(bf16),
                               (((1,), (1,)), ((), ())),
                               preferred_element_type=f32)

    # per-sample row masks for the stacked (TOT, .) layout
    row = lax.broadcasted_iota(jnp.int32, (TOT, 1), 0)
    sample_masks = [((row >= s * SEQ) & (row < (s + 1) * SEQ)).astype(f32)
                    for s in range(B)]
    n_elem = float(SEQ * HIDDEN_D)

    def layer_norm(x, g, b):
        # per-sample LayerNorm over (SEQ, HIDDEN_D), two-pass, masked reductions
        mu = jnp.zeros((TOT, 1), f32)
        for m in sample_masks:
            mu = mu + m * (jnp.sum(x * m) / n_elem)
        d = x - mu
        var = jnp.zeros((TOT, 1), f32)
        for m in sample_masks:
            var = var + m * (jnp.sum(d * d * m) / n_elem)
        return d * lax.rsqrt(var + EPS) * g + b

    # additive block mask forbidding cross-sample attention in the stacked scores
    gi = lax.broadcasted_iota(jnp.int32, (TOT, TOT), 0)
    gj = lax.broadcasted_iota(jnp.int32, (TOT, TOT), 1)
    same = jnp.zeros((TOT, TOT), jnp.bool_)
    for s in range(B):
        in_i = (gi >= s * SEQ) & (gi < (s + 1) * SEQ)
        in_j = (gj >= s * SEQ) & (gj < (s + 1) * SEQ)
        same = same | (in_i & in_j)
    attn_bias = jnp.where(same, 0.0, -1e30).astype(f32)

    # 1) patch -> token linear (cls rows are zero input; cls + bias live in posb)
    tokens = mm(x_ref[...], pv("wmap")) + pv("posb")                 # (TOT, 32)

    # 2) LN1 + MSA (fused block-diagonal QKV, per-head scores/AV over both samples)
    x1 = layer_norm(tokens, pv("g1"), pv("b1"))
    qkv = mm(x1, pv("wqkv")) + pv("bqkv")                            # (TOT, 96)
    scale = 1.0 / (D_HEAD ** 0.5)
    heads = []
    for h in range(N_HEADS):
        q = qkv[:, h * D_HEAD:(h + 1) * D_HEAD]
        k = qkv[:, HIDDEN_D + h * D_HEAD:HIDDEN_D + (h + 1) * D_HEAD]
        v = qkv[:, 2 * HIDDEN_D + h * D_HEAD:2 * HIDDEN_D + (h + 1) * D_HEAD]
        s = mm_nt(q, k) * scale + attn_bias                          # (TOT, TOT)
        e = jnp.exp(s)                 # no max-subtraction: scores are tiny post-LN
        attn = e * pl.reciprocal(jnp.sum(e, axis=-1, keepdims=True), approx=True)
        heads.append(mm(attn, v))                                    # (TOT, D_HEAD)
    msa = jnp.concatenate(heads, axis=-1)                            # (TOT, 32)

    # 3) residual + LN2 + MLP(ReLU) + residual
    out1 = tokens + msa
    x2 = layer_norm(out1, pv("g2"), pv("b2"))
    enc = jnp.maximum(mm(x2, pv("wenc")) + pv("benc"), 0.0)
    out2 = out1 + enc

    # 4) classification head on each sample's class token + softmax.
    #    Lane-padded to 128; padded columns carry a -1e30 bias -> prob exactly 0.
    cls_rows = jnp.concatenate([out2[s * SEQ:s * SEQ + 1, :] for s in range(B)],
                               axis=0)                               # (B, 32)
    logits = mm(cls_rows, pv("wmlp")) + pv("bmlp")                   # (B, 128)
    logits = logits - jnp.max(logits, axis=-1, keepdims=True)
    el = jnp.exp(logits)
    out_ref[...] = el / jnp.sum(el, axis=-1, keepdims=True)          # (B, 128)


# ------------------------------ wrapper --------------------------------------
@jax.jit
def vit_forward(images, params):
    # same flat reshape as the PyTorch module (NOT a spatial patchify)
    patches = images.reshape(B, P2, INPUT_D)
    # stacked (B*SEQ, INPUT_D) layout; cls rows stay zero (cls is added via posb)
    x = jnp.zeros((B, SEQ, INPUT_D), jnp.float32)
    x = x.at[:, 1:, :].set(patches)
    x = x.reshape(TOT, INPUT_D)

    slab = pack_params(params)

    out = pl.pallas_call(
        vit_kernel,
        out_shape=jax.ShapeDtypeStruct((B, LANE), jnp.float32),
        grid=(1,),
        in_specs=[
            pl.BlockSpec((TOT, INPUT_D), lambda i: (0, 0)),
            pl.BlockSpec((SLAB_ROWS, LANE), lambda i: (0, 0)),
        ],
        out_specs=pl.BlockSpec((B, LANE), lambda i: (0, 0)),
        compiler_params=pltpu.CompilerParams(
            dimension_semantics=("arbitrary",)),
    )(x, slab)
    return out[:, :OUT_D]


# --------------------------- deterministic init -------------------------------
def init_params(key):
    ks = jax.random.split(key, 8)

    def linear(k, fan_in, fan_out):
        kw, kb = jax.random.split(k)
        lim = 1.0 / np.sqrt(fan_in)
        w = jax.random.uniform(kw, (fan_in, fan_out), jnp.float32, -lim, lim)
        b = jax.random.uniform(kb, (1, fan_out), jnp.float32, -lim, lim)
        return w, b

    def head_linear(k):
        ws, bs = [], []
        for kk in jax.random.split(k, N_HEADS):
            w, b = linear(kk, D_HEAD, D_HEAD)
            ws.append(w)
            bs.append(b)
        return jnp.stack(ws), jnp.stack(bs)       # (H, dh, dh), (H, 1, dh)

    wmap, bmap = linear(ks[0], INPUT_D, HIDDEN_D)
    cls = jax.random.uniform(ks[1], (1, HIDDEN_D), jnp.float32)   # torch.rand-like
    wq, bq = head_linear(ks[2])
    wk, bk = head_linear(ks[3])
    wv, bv = head_linear(ks[4])
    wenc, benc = linear(ks[5], HIDDEN_D, HIDDEN_D)
    wmlp, bmlp = linear(ks[6], HIDDEN_D, OUT_D)

    return dict(
        wmap=wmap, bmap=bmap, cls=cls,
        pos=get_positional_embeddings(SEQ, HIDDEN_D),
        g1=jnp.ones((SEQ, HIDDEN_D), jnp.float32),
        b1=jnp.zeros((SEQ, HIDDEN_D), jnp.float32),
        wq=wq, bq=bq, wk=wk, bk=bk, wv=wv, bv=bv,
        g2=jnp.ones((SEQ, HIDDEN_D), jnp.float32),
        b2=jnp.zeros((SEQ, HIDDEN_D), jnp.float32),
        wenc=wenc, benc=benc, wmlp=wmlp, bmlp=bmlp,
    )


# ------------------------------ JAX reference ---------------------------------
def vit_reference(images, params):
    patches = images.reshape(B, P2, INPUT_D)
    tokens = patches @ params["wmap"] + params["bmap"]
    cls = jnp.broadcast_to(params["cls"][None], (B, 1, HIDDEN_D))
    tokens = jnp.concatenate([cls, tokens], axis=1) + params["pos"][None]

    def ln(x, g, b):
        mu = jnp.mean(x, axis=(1, 2), keepdims=True)
        var = jnp.mean((x - mu) ** 2, axis=(1, 2), keepdims=True)
        return (x - mu) / jnp.sqrt(var + EPS) * g + b

    x1 = ln(tokens, params["g1"], params["b1"])
    heads = []
    for h in range(N_HEADS):
        xh = x1[:, :, h * D_HEAD:(h + 1) * D_HEAD]
        q = xh @ params["wq"][h] + params["bq"][h]
        k = xh @ params["wk"][h] + params["bk"][h]
        v = xh @ params["wv"][h] + params["bv"][h]
        s = jnp.einsum("bqd,bkd->bqk", q, k) / (D_HEAD ** 0.5)
        a = jax.nn.softmax(s, axis=-1)
        heads.append(jnp.einsum("bqk,bkd->bqd", a, v))
    msa = jnp.concatenate(heads, axis=-1)

    out1 = tokens + msa
    x2 = ln(out1, params["g2"], params["b2"])
    out2 = out1 + jnp.maximum(x2 @ params["wenc"] + params["benc"], 0.0)
    logits = out2[:, 0] @ params["wmlp"] + params["bmlp"]
    return jax.nn.softmax(logits, axis=-1)


# --------------------------------- main ---------------------------------------
if __name__ == "__main__":
    key = jax.random.PRNGKey(0)
    k_img, k_param = jax.random.split(key)
    images = jax.random.normal(k_img, (B, C, H, W), jnp.float32)   # layout: NCHW
    params = init_params(k_param)

    out = vit_forward(images, params)
    out = jax.block_until_ready(out)

    ref = vit_reference(images, params)
    assert out.shape == (B, OUT_D)
    # Tolerance accounts for intentional bf16 MXU operands + approx reciprocal.
    np.testing.assert_allclose(np.asarray(out), np.asarray(ref), rtol=2e-2, atol=2e-2)
    print("KERNEL_OK")
</pallas_src>

<mosaic_0001>
module attributes {stable_mosaic.version = 11 : i64} {
  func.func @vit_kernel(%arg0: i32, %arg1: memref<34x64xf32, #tpu.memory_space<vmem>>, %arg2: memref<384x128xf32, #tpu.memory_space<vmem>>, %arg3: memref<2x128xf32, #tpu.memory_space<vmem>>) attributes {dimension_semantics = [#tpu.dimension_semantics<arbitrary>], iteration_bounds = array<i64: 1>, scalar_prefetch = 0 : i64, scratch_operands = 0 : i64, tpu.core_type = #tpu.core_type<tc>, window_params = [{pipeline_mode = #tpu.pipeline_mode<synchronous>, transform_indices = @transform_0, window_bounds = array<i64: 34, 64>}, {pipeline_mode = #tpu.pipeline_mode<synchronous>, transform_indices = @transform_1, window_bounds = array<i64: 384, 128>}, {pipeline_mode = #tpu.pipeline_mode<synchronous>, transform_indices = @transform_2, window_bounds = array<i64: 2, 128>}]} {
    %0 = tpu.iota {dimensions = array<i32: 0>} : vector<34x1xi32>
    %c0_i32 = arith.constant 0 : i32
    %1 = vector.broadcast %c0_i32 : i32 to vector<34x1xi32>
    %2 = arith.cmpi sge, %0, %1 : vector<34x1xi32>
    %c17_i32 = arith.constant 17 : i32
    %3 = vector.broadcast %c17_i32 : i32 to vector<34x1xi32>
    %4 = arith.cmpi slt, %0, %3 : vector<34x1xi32>
    %5 = arith.andi %2, %4 : vector<34x1xi1>
    %6 = arith.extui %5 : vector<34x1xi1> to vector<34x1xi32>
    %7 = arith.sitofp %6 : vector<34x1xi32> to vector<34x1xf32>
    %c17_i32_0 = arith.constant 17 : i32
    %8 = vector.broadcast %c17_i32_0 : i32 to vector<34x1xi32>
    %9 = arith.cmpi sge, %0, %8 : vector<34x1xi32>
    %c34_i32 = arith.constant 34 : i32
    %10 = vector.broadcast %c34_i32 : i32 to vector<34x1xi32>
    %11 = arith.cmpi slt, %0, %10 : vector<34x1xi32>
    %12 = arith.andi %9, %11 : vector<34x1xi1>
    %13 = arith.extui %12 : vector<34x1xi1> to vector<34x1xi32>
    %14 = arith.sitofp %13 : vector<34x1xi32> to vector<34x1xf32>
    %15 = tpu.iota {dimensions = array<i32: 0>} : vector<34x34xi32>
    %16 = tpu.iota {dimensions = array<i32: 1>} : vector<34x34xi32>
    %false = arith.constant false
    %17 = vector.broadcast %false : i1 to vector<34x34xi1>
    %c0_i32_1 = arith.constant 0 : i32
    %18 = vector.broadcast %c0_i32_1 : i32 to vector<34x34xi32>
    %19 = arith.cmpi sge, %15, %18 : vector<34x34xi32>
    %c17_i32_2 = arith.constant 17 : i32
    %20 = vector.broadcast %c17_i32_2 : i32 to vector<34x34xi32>
    %21 = arith.cmpi slt, %15, %20 : vector<34x34xi32>
    %22 = arith.andi %19, %21 : vector<34x34xi1>
    %c0_i32_3 = arith.constant 0 : i32
    %23 = vector.broadcast %c0_i32_3 : i32 to vector<34x34xi32>
    %24 = arith.cmpi sge, %16, %23 : vector<34x34xi32>
    %c17_i32_4 = arith.constant 17 : i32
    %25 = vector.broadcast %c17_i32_4 : i32 to vector<34x34xi32>
    %26 = arith.cmpi slt, %16, %25 : vector<34x34xi32>
    %27 = arith.andi %24, %26 : vector<34x34xi1>
    %28 = arith.andi %22, %27 : vector<34x34xi1>
    %29 = arith.ori %17, %28 : vector<34x34xi1>
    %c17_i32_5 = arith.constant 17 : i32
    %30 = vector.broadcast %c17_i32_5 : i32 to vector<34x34xi32>
    %31 = arith.cmpi sge, %15, %30 : vector<34x34xi32>
    %c34_i32_6 = arith.constant 34 : i32
    %32 = vector.broadcast %c34_i32_6 : i32 to vector<34x34xi32>
    %33 = arith.cmpi slt, %15, %32 : vector<34x34xi32>
    %34 = arith.andi %31, %33 : vector<34x34xi1>
    %c17_i32_7 = arith.constant 17 : i32
    %35 = vector.broadcast %c17_i32_7 : i32 to vector<34x34xi32>
    %36 = arith.cmpi sge, %16, %35 : vector<34x34xi32>
    %c34_i32_8 = arith.constant 34 : i32
    %37 = vector.broadcast %c34_i32_8 : i32 to vector<34x34xi32>
    %38 = arith.cmpi slt, %16, %37 : vector<34x34xi32>
    %39 = arith.andi %36, %38 : vector<34x34xi1>
    %40 = arith.andi %34, %39 : vector<34x34xi1>
    %41 = arith.ori %29, %40 : vector<34x34xi1>
    %cst = arith.constant 0.000000e+00 : f32
    %cst_9 = arith.constant -1.000000e+30 : f32
    %42 = vector.broadcast %cst : f32 to vector<34x34xf32>
    %43 = vector.broadcast %cst_9 : f32 to vector<34x34xf32>
    %44 = arith.select %41, %42, %43 : vector<34x34xi1>, vector<34x34xf32>
    %c0 = arith.constant 0 : index
    %c0_10 = arith.constant 0 : index
    %45 = vector.load %arg1[%c0, %c0_10] : memref<34x64xf32, #tpu.memory_space<vmem>>, vector<34x64xf32>
    %c0_11 = arith.constant 0 : index
    %c0_12 = arith.constant 0 : index
    %46 = vector.load %arg2[%c0_11, %c0_12] : memref<384x128xf32, #tpu.memory_space<vmem>>, vector<64x32xf32>
    %47 = arith.truncf %45 : vector<34x64xf32> to vector<34x64xbf16>
    %48 = arith.truncf %46 : vector<64x32xf32> to vector<64x32xbf16>
    %cst_13 = arith.constant dense<0.000000e+00> : vector<34x32xf32>
    %49 = tpu.matmul %47, %48, %cst_13 {dimension_numbers = #tpu.dot_dimension_numbers<[1], [0], [0], [1], [0, 0, 1, 1], [], []>} : vector<34x64xbf16>, vector<64x32xbf16>, vector<34x32xf32> -> vector<34x32xf32>
    %c64 = arith.constant 64 : index
    %c0_14 = arith.constant 0 : index
    %50 = vector.load %arg2[%c64, %c0_14] : memref<384x128xf32, #tpu.memory_space<vmem>>, vector<34x32xf32>
    %51 = arith.addf %49, %50 : vector<34x32xf32>
    %c104 = arith.constant 104 : index
    %c0_15 = arith.constant 0 : index
    %52 = vector.load %arg2[%c104, %c0_15] : memref<384x128xf32, #tpu.memory_space<vmem>>, vector<34x32xf32>
    %c144 = arith.constant 144 : index
    %c0_16 = arith.constant 0 : index
    %53 = vector.load %arg2[%c144, %c0_16] : memref<384x128xf32, #tpu.memory_space<vmem>>, vector<34x32xf32>
    %cst_17 = arith.constant 0.000000e+00 : f32
    %54 = vector.broadcast %cst_17 : f32 to vector<34x1xf32>
    %55 = vector.broadcast %7 : vector<34x1xf32> to vector<34x32xf32>
    %56 = arith.mulf %51, %55 : vector<34x32xf32>
    %57 = vector.shape_cast %56 : vector<34x32xf32> to vector<1x34x32xf32>
    %cst_18 = arith.constant dense<0.000000e+00> : vector<1xf32>
    %58 = vector.multi_reduction <add>, %57, %cst_18 [1, 2] : vector<1x34x32xf32> to vector<1xf32>
    %59 = vector.shape_cast %58 : vector<1xf32> to vector<1x1x1xf32>
    %60 = vector.extract %59[0, 0, 0] : f32 from vector<1x1x1xf32>
    %cst_19 = arith.constant 5.440000e+02 : f32
    %61 = arith.divf %60, %cst_19 : f32
    %62 = vector.broadcast %61 : f32 to vector<34x1xf32>
    %63 = arith.mulf %7, %62 : vector<34x1xf32>
    %64 = arith.addf %54, %63 : vector<34x1xf32>
    %65 = vector.broadcast %14 : vector<34x1xf32> to vector<34x32xf32>
    %66 = arith.mulf %51, %65 : vector<34x32xf32>
    %67 = vector.shape_cast %66 : vector<34x32xf32> to vector<1x34x32xf32>
    %cst_20 = arith.constant dense<0.000000e+00> : vector<1xf32>
    %68 = vector.multi_reduction <add>, %67, %cst_20 [1, 2] : vector<1x34x32xf32> to vector<1xf32>
    %69 = vector.shape_cast %68 : vector<1xf32> to vector<1x1x1xf32>
    %70 = vector.extract %69[0, 0, 0] : f32 from vector<1x1x1xf32>
    %cst_21 = arith.constant 5.440000e+02 : f32
    %71 = arith.divf %70, %cst_21 : f32
    %72 = vector.broadcast %71 : f32 to vector<34x1xf32>
    %73 = arith.mulf %14, %72 : vector<34x1xf32>
    %74 = arith.addf %64, %73 : vector<34x1xf32>
    %75 = vector.broadcast %74 : vector<34x1xf32> to vector<34x32xf32>
    %76 = arith.subf %51, %75 : vector<34x32xf32>
    %cst_22 = arith.constant 0.000000e+00 : f32
    %77 = vector.broadcast %cst_22 : f32 to vector<34x1xf32>
    %78 = arith.mulf %76, %76 : vector<34x32xf32>
    %79 = vector.broadcast %7 : vector<34x1xf32> to vector<34x32xf32>
    %80 = arith.mulf %78, %79 : vector<34x32xf32>
    %81 = vector.shape_cast %80 : vector<34x32xf32> to vector<1x34x32xf32>
    %cst_23 = arith.constant dense<0.000000e+00> : vector<1xf32>
    %82 = vector.multi_reduction <add>, %81, %cst_23 [1, 2] : vector<1x34x32xf32> to vector<1xf32>
    %83 = vector.shape_cast %82 : vector<1xf32> to vector<1x1x1xf32>
    %84 = vector.extract %83[0, 0, 0] : f32 from vector<1x1x1xf32>
    %cst_24 = arith.constant 5.440000e+02 : f32
    %85 = arith.divf %84, %cst_24 : f32
    %86 = vector.broadcast %85 : f32 to vector<34x1xf32>
    %87 = arith.mulf %7, %86 : vector<34x1xf32>
    %88 = arith.addf %77, %87 : vector<34x1xf32>
    %89 = arith.mulf %76, %76 : vector<34x32xf32>
    %90 = vector.broadcast %14 : vector<34x1xf32> to vector<34x32xf32>
    %91 = arith.mulf %89, %90 : vector<34x32xf32>
    %92 = vector.shape_cast %91 : vector<34x32xf32> to vector<1x34x32xf32>
    %cst_25 = arith.constant dense<0.000000e+00> : vector<1xf32>
    %93 = vector.multi_reduction <add>, %92, %cst_25 [1, 2] : vector<1x34x32xf32> to vector<1xf32>
    %94 = vector.shape_cast %93 : vector<1xf32> to vector<1x1x1xf32>
    %95 = vector.extract %94[0, 0, 0] : f32 from vector<1x1x1xf32>
    %cst_26 = arith.constant 5.440000e+02 : f32
    %96 = arith.divf %95, %cst_26 : f32
    %97 = vector.broadcast %96 : f32 to vector<34x1xf32>
    %98 = arith.mulf %14, %97 : vector<34x1xf32>
    %99 = arith.addf %88, %98 : vector<34x1xf32>
    %cst_27 = arith.constant 9.99999974E-6 : f32
    %100 = vector.broadcast %cst_27 : f32 to vector<34x1xf32>
    %101 = arith.addf %99, %100 : vector<34x1xf32>
    %102 = math.rsqrt %101 : vector<34x1xf32>
    %103 = vector.broadcast %102 : vector<34x1xf32> to vector<34x32xf32>
    %104 = arith.mulf %76, %103 : vector<34x32xf32>
    %105 = arith.mulf %104, %52 : vector<34x32xf32>
    %106 = arith.addf %105, %53 : vector<34x32xf32>
    %c264 = arith.constant 264 : index
    %c0_28 = arith.constant 0 : index
    %107 = vector.load %arg2[%c264, %c0_28] : memref<384x128xf32, #tpu.memory_space<vmem>>, vector<32x96xf32>
    %108 = arith.truncf %106 : vector<34x32xf32> to vector<34x32xbf16>
    %109 = arith.truncf %107 : vector<32x96xf32> to vector<32x96xbf16>
    %cst_29 = arith.constant dense<0.000000e+00> : vector<34x96xf32>
    %110 = tpu.matmul %108, %109, %cst_29 {dimension_numbers = #tpu.dot_dimension_numbers<[1], [0], [0], [1], [0, 0, 1, 1], [], []>} : vector<34x32xbf16>, vector<32x96xbf16>, vector<34x96xf32> -> vector<34x96xf32>
    %c296 = arith.constant 296 : index
    %c0_30 = arith.constant 0 : index
    %111 = vector.load %arg2[%c296, %c0_30] : memref<384x128xf32, #tpu.memory_space<vmem>>, vector<1x96xf32>
    %112 = vector.broadcast %111 : vector<1x96xf32> to vector<34x96xf32>
    %113 = arith.addf %110, %112 : vector<34x96xf32>
    %114 = vector.extract_strided_slice %113 {offsets = [0, 0], sizes = [34, 16], strides = [1, 1]} : vector<34x96xf32> to vector<34x16xf32>
    %115 = vector.extract_strided_slice %113 {offsets = [0, 32], sizes = [34, 16], strides = [1, 1]} : vector<34x96xf32> to vector<34x16xf32>
    %116 = vector.extract_strided_slice %113 {offsets = [0, 64], sizes = [34, 16], strides = [1, 1]} : vector<34x96xf32> to vector<34x16xf32>
    %117 = arith.truncf %114 : vector<34x16xf32> to vector<34x16xbf16>
    %118 = arith.truncf %115 : vector<34x16xf32> to vector<34x16xbf16>
    %cst_31 = arith.constant dense<0.000000e+00> : vector<34x34xf32>
    %119 = tpu.matmul %117, %118, %cst_31 {dimension_numbers = #tpu.dot_dimension_numbers<[1], [1], [0], [0], [0, 0, 1, 0], [], []>} : vector<34x16xbf16>, vector<34x16xbf16>, vector<34x34xf32> -> vector<34x34xf32>
    %cst_32 = arith.constant 2.500000e-01 : f32
    %120 = vector.broadcast %cst_32 : f32 to vector<34x34xf32>
    %121 = arith.mulf %119, %120 : vector<34x34xf32>
    %122 = arith.addf %121, %44 : vector<34x34xf32>
    %123 = math.exp %122 : vector<34x34xf32>
    %cst_33 = arith.constant dense<0.000000e+00> : vector<34xf32>
    %124 = vector.multi_reduction <add>, %123, %cst_33 [1] : vector<34x34xf32> to vector<34xf32>
    %125 = vector.shape_cast %124 : vector<34xf32> to vector<34x1xf32>
    %126 = tpu.reciprocal %125 {approx = true} : vector<34x1xf32> -> vector<34x1xf32>
    %127 = vector.broadcast %126 : vector<34x1xf32> to vector<34x34xf32>
    %128 = arith.mulf %123, %127 : vector<34x34xf32>
    %129 = arith.truncf %128 : vector<34x34xf32> to vector<34x34xbf16>
    %130 = arith.truncf %116 : vector<34x16xf32> to vector<34x16xbf16>
    %cst_34 = arith.constant dense<0.000000e+00> : vector<34x16xf32>
    %131 = tpu.matmul %129, %130, %cst_34 {dimension_numbers = #tpu.dot_dimension_numbers<[1], [0], [0], [1], [0, 0, 1, 1], [], []>} : vector<34x34xbf16>, vector<34x16xbf16>, vector<34x16xf32> -> vector<34x16xf32>
    %132 = vector.extract_strided_slice %113 {offsets = [0, 16], sizes = [34, 16], strides = [1, 1]} : vector<34x96xf32> to vector<34x16xf32>
    %133 = vector.extract_strided_slice %113 {offsets = [0, 48], sizes = [34, 16], strides = [1, 1]} : vector<34x96xf32> to vector<34x16xf32>
    %134 = vector.extract_strided_slice %113 {offsets = [0, 80], sizes = [34, 16], strides = [1, 1]} : vector<34x96xf32> to vector<34x16xf32>
    %135 = arith.truncf %132 : vector<34x16xf32> to vector<34x16xbf16>
    %136 = arith.truncf %133 : vector<34x16xf32> to vector<34x16xbf16>
    %cst_35 = arith.constant dense<0.000000e+00> : vector<34x34xf32>
    %137 = tpu.matmul %135, %136, %cst_35 {dimension_numbers = #tpu.dot_dimension_numbers<[1], [1], [0], [0], [0, 0, 1, 0], [], []>} : vector<34x16xbf16>, vector<34x16xbf16>, vector<34x34xf32> -> vector<34x34xf32>
    %cst_36 = arith.constant 2.500000e-01 : f32
    %138 = vector.broadcast %cst_36 : f32 to vector<34x34xf32>
    %139 = arith.mulf %137, %138 : vector<34x34xf32>
    %140 = arith.addf %139, %44 : vector<34x34xf32>
    %141 = math.exp %140 : vector<34x34xf32>
    %cst_37 = arith.constant dense<0.000000e+00> : vector<34xf32>
    %142 = vector.multi_reduction <add>, %141, %cst_37 [1] : vector<34x34xf32> to vector<34xf32>
    %143 = vector.shape_cast %142 : vector<34xf32> to vector<34x1xf32>
    %144 = tpu.reciprocal %143 {approx = true} : vector<34x1xf32> -> vector<34x1xf32>
    %145 = vector.broadcast %144 : vector<34x1xf32> to vector<34x34xf32>
    %146 = arith.mulf %141, %145 : vector<34x34xf32>
    %147 = arith.truncf %146 : vector<34x34xf32> to vector<34x34xbf16>
    %148 = arith.truncf %134 : vector<34x16xf32> to vector<34x16xbf16>
    %cst_38 = arith.constant dense<0.000000e+00> : vector<34x16xf32>
    %149 = tpu.matmul %147, %148, %cst_38 {dimension_numbers = #tpu.dot_dimension_numbers<[1], [0], [0], [1], [0, 0, 1, 1], [], []>} : vector<34x34xbf16>, vector<34x16xbf16>, vector<34x16xf32> -> vector<34x16xf32>
    %150 = tpu.concatenate %131, %149 in 1 : vector<34x16xf32>, vector<34x16xf32> -> vector<34x32xf32>
    %151 = arith.addf %51, %150 : vector<34x32xf32>
    %c184 = arith.constant 184 : index
    %c0_39 = arith.constant 0 : index
    %152 = vector.load %arg2[%c184, %c0_39] : memref<384x128xf32, #tpu.memory_space<vmem>>, vector<34x32xf32>
    %c224 = arith.constant 224 : index
    %c0_40 = arith.constant 0 : index
    %153 = vector.load %arg2[%c224, %c0_40] : memref<384x128xf32, #tpu.memory_space<vmem>>, vector<34x32xf32>
    %cst_41 = arith.constant 0.000000e+00 : f32
    %154 = vector.broadcast %cst_41 : f32 to vector<34x1xf32>
    %155 = vector.broadcast %7 : vector<34x1xf32> to vector<34x32xf32>
    %156 = arith.mulf %151, %155 : vector<34x32xf32>
    %157 = vector.shape_cast %156 : vector<34x32xf32> to vector<1x34x32xf32>
    %cst_42 = arith.constant dense<0.000000e+00> : vector<1xf32>
    %158 = vector.multi_reduction <add>, %157, %cst_42 [1, 2] : vector<1x34x32xf32> to vector<1xf32>
    %159 = vector.shape_cast %158 : vector<1xf32> to vector<1x1x1xf32>
    %160 = vector.extract %159[0, 0, 0] : f32 from vector<1x1x1xf32>
    %cst_43 = arith.constant 5.440000e+02 : f32
    %161 = arith.divf %160, %cst_43 : f32
    %162 = vector.broadcast %161 : f32 to vector<34x1xf32>
    %163 = arith.mulf %7, %162 : vector<34x1xf32>
    %164 = arith.addf %154, %163 : vector<34x1xf32>
    %165 = vector.broadcast %14 : vector<34x1xf32> to vector<34x32xf32>
    %166 = arith.mulf %151, %165 : vector<34x32xf32>
    %167 = vector.shape_cast %166 : vector<34x32xf32> to vector<1x34x32xf32>
    %cst_44 = arith.constant dense<0.000000e+00> : vector<1xf32>
    %168 = vector.multi_reduction <add>, %167, %cst_44 [1, 2] : vector<1x34x32xf32> to vector<1xf32>
    %169 = vector.shape_cast %168 : vector<1xf32> to vector<1x1x1xf32>
    %170 = vector.extract %169[0, 0, 0] : f32 from vector<1x1x1xf32>
    %cst_45 = arith.constant 5.440000e+02 : f32
    %171 = arith.divf %170, %cst_45 : f32
    %172 = vector.broadcast %171 : f32 to vector<34x1xf32>
    %173 = arith.mulf %14, %172 : vector<34x1xf32>
    %174 = arith.addf %164, %173 : vector<34x1xf32>
    %175 = vector.broadcast %174 : vector<34x1xf32> to vector<34x32xf32>
    %176 = arith.subf %151, %175 : vector<34x32xf32>
    %cst_46 = arith.constant 0.000000e+00 : f32
    %177 = vector.broadcast %cst_46 : f32 to vector<34x1xf32>
    %178 = arith.mulf %176, %176 : vector<34x32xf32>
    %179 = vector.broadcast %7 : vector<34x1xf32> to vector<34x32xf32>
    %180 = arith.mulf %178, %179 : vector<34x32xf32>
    %181 = vector.shape_cast %180 : vector<34x32xf32> to vector<1x34x32xf32>
    %cst_47 = arith.constant dense<0.000000e+00> : vector<1xf32>
    %182 = vector.multi_reduction <add>, %181, %cst_47 [1, 2] : vector<1x34x32xf32> to vector<1xf32>
    %183 = vector.shape_cast %182 : vector<1xf32> to vector<1x1x1xf32>
    %184 = vector.extract %183[0, 0, 0] : f32 from vector<1x1x1xf32>
    %cst_48 = arith.constant 5.440000e+02 : f32
    %185 = arith.divf %184, %cst_48 : f32
    %186 = vector.broadcast %185 : f32 to vector<34x1xf32>
    %187 = arith.mulf %7, %186 : vector<34x1xf32>
    %188 = arith.addf %177, %187 : vector<34x1xf32>
    %189 = arith.mulf %176, %176 : vector<34x32xf32>
    %190 = vector.broadcast %14 : vector<34x1xf32> to vector<34x32xf32>
    %191 = arith.mulf %189, %190 : vector<34x32xf32>
    %192 = vector.shape_cast %191 : vector<34x32xf32> to vector<1x34x32xf32>
    %cst_49 = arith.constant dense<0.000000e+00> : vector<1xf32>
    %193 = vector.multi_reduction <add>, %192, %cst_49 [1, 2] : vector<1x34x32xf32> to vector<1xf32>
    %194 = vector.shape_cast %193 : vector<1xf32> to vector<1x1x1xf32>
    %195 = vector.extract %194[0, 0, 0] : f32 from vector<1x1x1xf32>
    %cst_50 = arith.constant 5.440000e+02 : f32
    %196 = arith.divf %195, %cst_50 : f32
    %197 = vector.broadcast %196 : f32 to vector<34x1xf32>
    %198 = arith.mulf %14, %197 : vector<34x1xf32>
    %199 = arith.addf %188, %198 : vector<34x1xf32>
    %cst_51 = arith.constant 9.99999974E-6 : f32
    %200 = vector.broadcast %cst_51 : f32 to vector<34x1xf32>
    %201 = arith.addf %199, %200 : vector<34x1xf32>
    %202 = math.rsqrt %201 : vector<34x1xf32>
    %203 = vector.broadcast %202 : vector<34x1xf32> to vector<34x32xf32>
    %204 = arith.mulf %176, %203 : vector<34x32xf32>
    %205 = arith.mulf %204, %152 : vector<34x32xf32>
    %206 = arith.addf %205, %153 : vector<34x32xf32>
    %c304 = arith.constant 304 : index
    %c0_52 = arith.constant 0 : index
    %207 = vector.load %arg2[%c304, %c0_52] : memref<384x128xf32, #tpu.memory_space<vmem>>, vector<32x32xf32>
    %208 = arith.truncf %206 : vector<34x32xf32> to vector<34x32xbf16>
    %209 = arith.truncf %207 : vector<32x32xf32> to vector<32x32xbf16>
    %cst_53 = arith.constant dense<0.000000e+00> : vector<34x32xf32>
    %210 = tpu.matmul %208, %209, %cst_53 {dimension_numbers = #tpu.dot_dimension_numbers<[1], [0], [0], [1], [0, 0, 1, 1], [], []>} : vector<34x32xbf16>, vector<32x32xbf16>, vector<34x32xf32> -> vector<34x32xf32>
    %c336 = arith.constant 336 : index
    %c0_54 = arith.constant 0 : index
    %211 = vector.load %arg2[%c336, %c0_54] : memref<384x128xf32, #tpu.memory_space<vmem>>, vector<1x32xf32>
    %212 = vector.broadcast %211 : vector<1x32xf32> to vector<34x32xf32>
    %213 = arith.addf %210, %212 : vector<34x32xf32>
    %cst_55 = arith.constant 0.000000e+00 : f32
    %214 = vector.broadcast %cst_55 : f32 to vector<34x32xf32>
    %215 = arith.maximumf %213, %214 : vector<34x32xf32>
    %216 = arith.addf %151, %215 : vector<34x32xf32>
    %217 = vector.extract_strided_slice %216 {offsets = [0, 0], sizes = [1, 32], strides = [1, 1]} : vector<34x32xf32> to vector<1x32xf32>
    %218 = vector.extract_strided_slice %216 {offsets = [17, 0], sizes = [1, 32], strides = [1, 1]} : vector<34x32xf32> to vector<1x32xf32>
    %219 = tpu.concatenate %217, %218 in 0 : vector<1x32xf32>, vector<1x32xf32> -> vector<2x32xf32>
    %c344 = arith.constant 344 : index
    %c0_56 = arith.constant 0 : index
    %220 = vector.load %arg2[%c344, %c0_56] : memref<384x128xf32, #tpu.memory_space<vmem>>, vector<32x128xf32>
    %221 = arith.truncf %219 : vector<2x32xf32> to vector<2x32xbf16>
    %222 = arith.truncf %220 : vector<32x128xf32> to vector<32x128xbf16>
    %cst_57 = arith.constant dense<0.000000e+00> : vector<2x128xf32>
    %223 = tpu.matmul %221, %222, %cst_57 {dimension_numbers = #tpu.dot_dimension_numbers<[1], [0], [0], [1], [0, 0, 1, 1], [], []>} : vector<2x32xbf16>, vector<32x128xbf16>, vector<2x128xf32> -> vector<2x128xf32>
    %c376 = arith.constant 376 : index
    %c0_58 = arith.constant 0 : index
    %224 = vector.load %arg2[%c376, %c0_58] : memref<384x128xf32, #tpu.memory_space<vmem>>, vector<1x128xf32>
    %225 = vector.broadcast %224 : vector<1x128xf32> to vector<2x128xf32>
    %226 = arith.addf %223, %225 : vector<2x128xf32>
    %cst_59 = arith.constant dense<0xFF800000> : vector<2xf32>
    %227 = vector.multi_reduction <maximumf>, %226, %cst_59 [1] : vector<2x128xf32> to vector<2xf32>
    %228 = vector.shape_cast %227 : vector<2xf32> to vector<2x1xf32>
    %229 = vector.broadcast %228 : vector<2x1xf32> to vector<2x128xf32>
    %230 = arith.subf %226, %229 : vector<2x128xf32>
    %231 = math.exp %230 : vector<2x128xf32>
    %cst_60 = arith.constant dense<0.000000e+00> : vector<2xf32>
    %232 = vector.multi_reduction <add>, %231, %cst_60 [1] : vector<2x128xf32> to vector<2xf32>
    %233 = vector.shape_cast %232 : vector<2xf32> to vector<2x1xf32>
    %234 = vector.broadcast %233 : vector<2x1xf32> to vector<2x128xf32>
    %235 = arith.divf %231, %234 : vector<2x128xf32>
    %c0_61 = arith.constant 0 : index
    %c0_62 = arith.constant 0 : index
    %236 = vector.load %arg3[%c0_61, %c0_62] : memref<2x128xf32, #tpu.memory_space<vmem>>, vector<2x128xf32>
    tpu.vector_store %arg3[%c0_61, %c0_62], %235 {strides = array<i32>} : memref<2x128xf32, #tpu.memory_space<vmem>>, vector<2x128xf32>,
    return
  }
  func.func @transform_0(%arg0: i32) -> (i32, i32) {
    %c0_i32 = arith.constant 0 : i32
    %c0_i32_0 = arith.constant 0 : i32
    %c0_i32_1 = arith.constant 0 : i32
    return %c0_i32, %c0_i32_0 : i32, i32
  }
  func.func @transform_1(%arg0: i32) -> (i32, i32) {
    %c0_i32 = arith.constant 0 : i32
    %c0_i32_0 = arith.constant 0 : i32
    %c0_i32_1 = arith.constant 0 : i32
    return %c0_i32, %c0_i32_0 : i32, i32
  }
  func.func @transform_2(%arg0: i32) -> (i32, i32) {
    %c0_i32 = arith.constant 0 : i32
    %c0_i32_0 = arith.constant 0 : i32
    %c0_i32_1 = arith.constant 0 : i32
    return %c0_i32, %c0_i32_0 : i32, i32
  }
}

</mosaic_0001>

<llo_original>
// kernel: vit_forward.1
$region0: #{vit_forward.1}
  #allocation0 [shape = 'u32[]', space=smem, size = 0x4, offset = 0x4, fixed_abs, tag = 'smem constant byte address 0x4 - core index']
  #allocation1 [shape = 'u32[144,128]{1,0:T(1,128)}', space=vmem, size = 0x12000, scoped, tag = 'internal scratch']
  %s0 = inlined_call_operand.vmem [shape: f32[34,64], index: 0, kind: input, shape index: {}]
  %s1 = inlined_call_operand.vmem [shape: f32[384,128], index: 1, kind: input, shape index: {}]
  %s2 = inlined_call_operand.hbm [shape: f32[2,128], index: 2, kind: output, shape index: {}]
  %s3 = sld [smem:[#allocation0]]
  $region18: #{vit_forward.1} parent=0
    _
  %s5 = ssub.s32 1, %s3
  %s6 = scalar_select 0, %s5, %s3
  $region1: #{vit_forward.1} parent=0
    #allocation2 [shape = 'u8[1024]{0}', space=vmem, size = 0x400, scoped, tag = 'output window, operand 0, single buffered']
    #allocation3 [shape = 's32[1]{0}', space=sflag, size = 0x4, scoped, tag = 'scoped memory for vit_forward.1']
    %7 = vsyncpa [#allocation3], 0
    // Predicated region
    $region2: #{vit_forward.1} parent=1 // pred_check
      _
    $region3: #{vit_forward.1} parent=1 // pred_check_branch
      %9 = sbr.rel (0) target = $region5
    $region4: #{vit_forward.1} parent=1 // pred_region
      _
    $region5: #{vit_forward.1} parent=1 // pred_fallthru
      _
    // Predicated region
    $region6: #{vit_forward.1} parent=1 // pred_check
      _
    $region7: #{vit_forward.1} parent=1 // pred_check_branch
      %11 = sbr.rel (0) target = $region9
    $region8: #{vit_forward.1} parent=1 // pred_region
      _
    $region9: #{vit_forward.1} parent=1 // pred_fallthru
      _
    %v13 = vlaneseq
    %v14 = vshrl.u32 %v13, 7
    %v15 = vadd.s32 %v14, 8
    %v16 = vadd.s32 %v14, 16
    %v17 = vadd.s32 %v14, 24
    %v18 = vadd.s32 %v14, 32
    %vm19 = vcmp.ge.s32.totalorder %v14, 0
    %vm20 = vcmp.ge.s32.totalorder %v15, 0
    %vm21 = vcmp.ge.s32.totalorder %v16, 0
    %vm22 = vcmp.ge.s32.totalorder %v17, 0
    %vm23 = vcmp.ge.s32.totalorder %v18, 0
    %vm24 = vcmp.lt.s32.totalorder %v14, 17
    %vm25 = vcmp.lt.s32.totalorder %v15, 17
    %vm26 = vcmp.lt.s32.totalorder %v16, 17
    %vm27 = vcmp.lt.s32.totalorder %v17, 17
    %vm28 = vcmp.lt.s32.totalorder %v18, 17
    %vm29 = vmand %vm19, %vm24
    %vm30 = vmand %vm20, %vm25
    %vm31 = vmand %vm21, %vm26
    %vm32 = vmand %vm22, %vm27
    %vm33 = vmand %vm23, %vm28
    %v34 = vsel %vm29, 1, 0
    %v35 = vsel %vm30, 1, 0
    %v36 = vsel %vm31, 1, 0
    %v37 = vsel %vm32, 1, 0
    %v38 = vsel %vm33, 1, 0
    %v39 = vcvt.s32.f32 %v34
    %v40 = vcvt.s32.f32 %v35
    %v41 = vcvt.s32.f32 %v36
    %v42 = vcvt.s32.f32 %v37
    %v43 = vcvt.s32.f32 %v38
    %vm44 = vcmp.ge.s32.totalorder %v14, 17
    %vm45 = vcmp.ge.s32.totalorder %v15, 17
    %vm46 = vcmp.ge.s32.totalorder %v16, 17
    %vm47 = vcmp.ge.s32.totalorder %v17, 17
    %vm48 = vcmp.ge.s32.totalorder %v18, 17
    %vm49 = vcmp.lt.s32.totalorder %v14, 34
    %vm50 = vcmp.lt.s32.totalorder %v15, 34
    %vm51 = vcmp.lt.s32.totalorder %v16, 34
    %vm52 = vcmp.lt.s32.totalorder %v17, 34
    %vm53 = vcmp.lt.s32.totalorder %v18, 34
    %vm54 = vmand %vm44, %vm49
    %vm55 = vmand %vm45, %vm50
    %vm56 = vmand %vm46, %vm51
    %vm57 = vmand %vm47, %vm52
    %vm58 = vmand %vm48, %vm53
    %v59 = vsel %vm54, 1, 0
    %v60 = vsel %vm55, 1, 0
    %v61 = vsel %vm56, 1, 0
    %v62 = vsel %vm57, 1, 0
    %v63 = vsel %vm58, 1, 0
    %v64 = vcvt.s32.f32 %v59
    %v65 = vcvt.s32.f32 %v60
    %v66 = vcvt.s32.f32 %v61
    %v67 = vcvt.s32.f32 %v62
    %v68 = vcvt.s32.f32 %v63
    %v69 = vlaneseq
    %v70 = vand.u32 %v69, 127
    %vm71 = vcmp.ge.s32.totalorder %v70, 0
    %vm72 = vcmp.lt.s32.totalorder %v70, 17
    %vm73 = vmand %vm71, %vm72
    %vm74 = vmand %vm29, %vm73
    %vm75 = vmand %vm30, %vm73
    %vm76 = vmand %vm31, %vm73
    %vm77 = vmand %vm32, %vm73
    %vm78 = vmand %vm33, %vm73
    %vm79 = vcmp.ge.s32.totalorder %v70, 17
    %vm80 = vcmp.lt.s32.totalorder %v70, 34
    %vm81 = vmand %vm79, %vm80
    %vm82 = vmand %vm54, %vm81
    %vm83 = vmand %vm55, %vm81
    %vm84 = vmand %vm56, %vm81
    %vm85 = vmand %vm57, %vm81
    %vm86 = vmand %vm58, %vm81
    %vm87 = vmor %vm74, %vm82
    %vm88 = vmor %vm75, %vm83
    %vm89 = vmor %vm76, %vm84
    %vm90 = vmor %vm77, %vm85
    %vm91 = vmor %vm78, %vm86
    %v92 = vsel %vm87, 0.0, -1e+30
    %v93 = vsel %vm88, 0.0, -1e+30
    %v94 = vsel %vm89, 0.0, -1e+30
    %v95 = vsel %vm90, 0.0, -1e+30
    %v96 = vsel %vm91, 0.0, -1e+30
    %v97 = vld [vmem:[%s0] sm:$0xff]
    %v98 = vld [vmem:[%s0 + $0x8] sm:$0xff]
    %v99 = vld [vmem:[%s0 + $0x10] sm:$0xff]
    %v100 = vld [vmem:[%s0 + $0x18] sm:$0xff]
    %v101 = vld [vmem:[%s0 + $0x20] sm:$0x3]
    %v102 = vld [vmem:[%s1] sm:$0xff]
    %v103 = vld [vmem:[%s1 + $0x8] sm:$0xff]
    %v104 = vld [vmem:[%s1 + $0x10] sm:$0xff]
    %v105 = vld [vmem:[%s1 + $0x18] sm:$0xff]
    %v106 = vld [vmem:[%s1 + $0x20] sm:$0xff]
    %v107 = vld [vmem:[%s1 + $0x28] sm:$0xff]
    %v108 = vld [vmem:[%s1 + $0x30] sm:$0xff]
    %v109 = vld [vmem:[%s1 + $0x38] sm:$0xff]
    %v110 = vpack.c.bf16 %v98, %v97
    %v111 = vpack.c.bf16 %v100, %v99
    %v112 = vpack.c.bf16 %v101, %v101
    %v113 = vpack.c.bf16 %v103, %v102
    %v114 = vpack.c.bf16 %v105, %v104
    %v115 = vpack.c.bf16 %v107, %v106
    %v116 = vpack.c.bf16 %v109, %v108
    %v117 = vld [vmem:[%s1 + $0x40] sm:$0xff]
    %v118 = vld [vmem:[%s1 + $0x48] sm:$0xff]
    %v119 = vld [vmem:[%s1 + $0x50] sm:$0xff]
    %v120 = vld [vmem:[%s1 + $0x58] sm:$0xff]
    %v121 = vld [vmem:[%s1 + $0x60] sm:$0x3]
    %vm122 = vcmask 523264
    %v124 = vsel %vm122, %v110, 0
    %v127 = vsel %vm122, %v111, 0
    %v130 = vsel %vm122, %v112, 0
    %132 = vmatprep.subr.bf16.mxu0 0
    %133 = vmatpush1.bf16.msra.mxu0 %v113
    %134 = vmatprep.subr.bf16.mxu0 0
    %135 = vmatpush1.bf16.msra.mxu0 %v114
    %136 = vmatprep.subr.bf16.mxu0 0
    %137 = vmatpush1.bf16.msra.mxu0 %v115
    %138 = vmatprep.subr.bf16.mxu0 0
    %139 = vmatpush1.bf16.msra.mxu0 %v116
    %140 = vmatprep.subr.bf16.mxu0 0
    %141 = vmatpush1.bf16.msra.mxu0 0
    %142 = vmatprep.subr.bf16.mxu0 0
    %143 = vmatpush1.bf16.msra.mxu0 0
    %144 = vmatprep.subr.bf16.mxu0 0
    %145 = vmatpush1.bf16.msra.mxu0 0
    %146 = vmatprep.subr.bf16.mxu0 0
    %147 = vmatpush1.bf16.msra.mxu0 0
    %148 = vmatprep.subr.bf16.mxu0 0
    %149 = vmatpush1.bf16.msra.mxu0 0
    %150 = vmatprep.subr.bf16.mxu0 0
    %151 = vmatpush1.bf16.msra.mxu0 0
    %152 = vmatprep.subr.bf16.mxu0 0
    %153 = vmatpush1.bf16.msra.mxu0 0
    %154 = vmatprep.subr.bf16.mxu0 0
    %155 = vmatpush1.bf16.msra.mxu0 0
    %156 = vmatprep.subr.bf16.mxu0 0
    %157 = vmatpush1.bf16.msra.mxu0 0
    %158 = vmatprep.subr.bf16.mxu0 0
    %159 = vmatpush1.bf16.msra.mxu0 0
    %160 = vmatprep.subr.bf16.mxu0 0
    %161 = vmatpush1.bf16.msra.mxu0 0
    %162 = vmatprep.subr.bf16.mxu0 0
    %163 = vmatpush1.bf16.msra.mxu0 0
    %164 = vmatprep.mubr.bf16.mxu0 0
    %165 = vmatmul.mubr.bf16.gmra.mrb[0].mxu0 %v124
    %v166 = vpop.f32.mrb[0].mxu0
    %v167 = vadd.f32 %v117, %v166
    %v168 = vpop.f32.mrb[0].mxu0
    %v169 = vpop.f32.mrb[0].mxu0
    %v170 = vadd.f32 %v118, %v169
    %v171 = vpop.f32.mrb[0].mxu0
    %172 = vmatprep.mubr.bf16.mxu0 0
    %173 = vmatmul.mubr.bf16.gmra.mrb[0].mxu0 %v127
    %v174 = vpop.f32.mrb[0].mxu0
    %v175 = vadd.f32 %v119, %v174
    %v176 = vpop.f32.mrb[0].mxu0
    %v177 = vpop.f32.mrb[0].mxu0
    %v178 = vadd.f32 %v120, %v177
    %v179 = vpop.f32.mrb[0].mxu0
    %180 = vmatprep.mubr.bf16.mxu0 0
    %181 = vmatmul.mubr.bf16.gmra.mrb[0].mxu0 %v130
    %v182 = vpop.f32.mrb[0].mxu0
    %v183 = vadd.f32 %v121, %v182
    %v184 = vpop.f32.mrb[0].mxu0
    %v185 = vpop.f32.mrb[0].mxu0
    %v186 = vpop.f32.mrb[0].mxu0
    %187 = vdwg.mxu0
    %v188 = vld [vmem:[%s1 + $0x68] sm:$0xff]
    %v189 = vld [vmem:[%s1 + $0x70] sm:$0xff]
    %v190 = vld [vmem:[%s1 + $0x78] sm:$0xff]
    %v191 = vld [vmem:[%s1 + $0x80] sm:$0xff]
    %v192 = vld [vmem:[%s1 + $0x88] sm:$0x3]
    %v193 = vld [vmem:[%s1 + $0x90] sm:$0xff]
    %v194 = vld [vmem:[%s1 + $0x98] sm:$0xff]
    %v195 = vld [vmem:[%s1 + $0xa0] sm:$0xff]
    %v196 = vld [vmem:[%s1 + $0xa8] sm:$0xff]
    %v197 = vld [vmem:[%s1 + $0xb0] sm:$0x3]
    %v198 = vmul.f32 %v167, %v39
    %v199 = vmul.f32 %v170, %v40
    %v200 = vmul.f32 %v175, %v41
    %v201 = vmul.f32 %v178, %v42
    %v202 = vmul.f32 %v183, %v43
    %vm203 = vcmask 261120
    %v204 = vsel %vm203, %v198, 0.0
    %v205 = vsel %vm203, %v199, 0.0
    %v206 = vadd.f32 %v204, %v205
    %v207 = vsel %vm203, %v200, 0.0
    %v208 = vadd.f32 %v206, %v207
    %v209 = vsel %vm203, %v201, 0.0
    %v210 = vadd.f32 %v208, %v209
    %vm211 = vcmask 254976
    %v212 = vsel %vm211, %v202, 0.0
    %v213 = vadd.f32 %v210, %v212
    %214 = vadd.xlane.f32.xlu0 %v213
    %v215 = vpop.xlane.xlu0 %214
    %v216 = vrot.slane %v215, 4
    %v217 = vadd.f32 %v215, %v216
    %v218 = vrot.slane %v217, 2
    %v219 = vadd.f32 %v217, %v218
    %v220 = vrot.slane %v219, 1
    %v221 = vadd.f32 %v219, %v220
    %s222 = vtos %v221
    %v223 = vrcp.pop 544.0
    %s224 = vtos %v223
    %s225 = smul.f32 %s222, %s224
    %v226 = vstv %s225
    %v227 = vmul.f32 %v39, %v226
    %v228 = vmul.f32 %v40, %v226
    %v229 = vmul.f32 %v41, %v226
    %v230 = vmul.f32 %v42, %v226
    %v231 = vmul.f32 %v43, %v226
    %v232 = vadd.f32 %v227, 0.0
    %v233 = vadd.f32 %v228, 0.0
    %v234 = vadd.f32 %v229, 0.0
    %v235 = vadd.f32 %v230, 0.0
    %v236 = vadd.f32 %v231, 0.0
    %v237 = vmul.f32 %v167, %v64
    %v238 = vmul.f32 %v170, %v65
    %v239 = vmul.f32 %v175, %v66
    %v240 = vmul.f32 %v178, %v67
    %v241 = vmul.f32 %v183, %v68
    %v242 = vsel %vm203, %v237, 0.0
    %v243 = vsel %vm203, %v238, 0.0
    %v244 = vadd.f32 %v242, %v243
    %v245 = vsel %vm203, %v239, 0.0
    %v246 = vadd.f32 %v244, %v245
    %v247 = vsel %vm203, %v240, 0.0
    %v248 = vadd.f32 %v246, %v247
    %v249 = vsel %vm211, %v241, 0.0
    %v250 = vadd.f32 %v248, %v249
    %251 = vadd.xlane.f32.xlu0 %v250
    %v252 = vpop.xlane.xlu0 %251
    %v253 = vrot.slane %v252, 4
    %v254 = vadd.f32 %v252, %v253
    %v255 = vrot.slane %v254, 2
    %v256 = vadd.f32 %v254, %v255
    %v257 = vrot.slane %v256, 1
    %v258 = vadd.f32 %v256, %v257
    %s259 = vtos %v258
    %v260 = vrcp.pop 544.0
    %s261 = vtos %v260
    %s262 = smul.f32 %s259, %s261
    %v263 = vstv %s262
    %v264 = vmul.f32 %v64, %v263
    %v265 = vmul.f32 %v65, %v263
    %v266 = vmul.f32 %v66, %v263
    %v267 = vmul.f32 %v67, %v263
    %v268 = vmul.f32 %v68, %v263
    %v269 = vadd.f32 %v232, %v264
    %v270 = vadd.f32 %v233, %v265
    %v271 = vadd.f32 %v234, %v266
    %v272 = vadd.f32 %v235, %v267
    %v273 = vadd.f32 %v236, %v268
    %v274 = vsub.f32 %v167, %v269
    %v275 = vsub.f32 %v170, %v270
    %v276 = vsub.f32 %v175, %v271
    %v277 = vsub.f32 %v178, %v272
    %v278 = vsub.f32 %v183, %v273
    %v279 = vmul.f32 %v274, %v274
    %v280 = vmul.f32 %v275, %v275
    %v281 = vmul.f32 %v276, %v276
    %v282 = vmul.f32 %v277, %v277
    %v283 = vmul.f32 %v278, %v278
    %v284 = vmul.f32 %v279, %v39
    %v285 = vmul.f32 %v280, %v40
    %v286 = vmul.f32 %v281, %v41
    %v287 = vmul.f32 %v282, %v42
    %v288 = vmul.f32 %v283, %v43
    %v289 = vsel %vm203, %v284, 0.0
    %v290 = vsel %vm203, %v285, 0.0
    %v291 = vadd.f32 %v289, %v290
    %v292 = vsel %vm203, %v286, 0.0
    %v293 = vadd.f32 %v291, %v292
    %v294 = vsel %vm203, %v287, 0.0
    %v295 = vadd.f32 %v293, %v294
    %v296 = vsel %vm211, %v288, 0.0
    %v297 = vadd.f32 %v295, %v296
    %298 = vadd.xlane.f32.xlu0 %v297
    %v299 = vpop.xlane.xlu0 %298
    %v300 = vrot.slane %v299, 4
    %v301 = vadd.f32 %v299, %v300
    %v302 = vrot.slane %v301, 2
    %v303 = vadd.f32 %v301, %v302
    %v304 = vrot.slane %v303, 1
    %v305 = vadd.f32 %v303, %v304
    %s306 = vtos %v305
    %v307 = vrcp.pop 544.0
    %s308 = vtos %v307
    %s309 = smul.f32 %s306, %s308
    %v310 = vstv %s309
    %v311 = vmul.f32 %v39, %v310
    %v312 = vmul.f32 %v40, %v310
    %v313 = vmul.f32 %v41, %v310
    %v314 = vmul.f32 %v42, %v310
    %v315 = vmul.f32 %v43, %v310
    %v316 = vadd.f32 %v311, 0.0
    %v317 = vadd.f32 %v312, 0.0
    %v318 = vadd.f32 %v313, 0.0
    %v319 = vadd.f32 %v314, 0.0
    %v320 = vadd.f32 %v315, 0.0
    %v321 = vmul.f32 %v279, %v64
    %v322 = vmul.f32 %v280, %v65
    %v323 = vmul.f32 %v281, %v66
    %v324 = vmul.f32 %v282, %v67
    %v325 = vmul.f32 %v283, %v68
    %v326 = vsel %vm203, %v321, 0.0
    %v327 = vsel %vm203, %v322, 0.0
    %v328 = vadd.f32 %v326, %v327
    %v329 = vsel %vm203, %v323, 0.0
    %v330 = vadd.f32 %v328, %v329
    %v331 = vsel %vm203, %v324, 0.0
    %v332 = vadd.f32 %v330, %v331
    %v333 = vsel %vm211, %v325, 0.0
    %v334 = vadd.f32 %v332, %v333
    %335 = vadd.xlane.f32.xlu0 %v334
    %v336 = vpop.xlane.xlu0 %335
    %v337 = vrot.slane %v336, 4
    %v338 = vadd.f32 %v336, %v337
    %v339 = vrot.slane %v338, 2
    %v340 = vadd.f32 %v338, %v339
    %v341 = vrot.slane %v340, 1
    %v342 = vadd.f32 %v340, %v341
    %s343 = vtos %v342
    %v344 = vrcp.pop 544.0
    %s345 = vtos %v344
    %s346 = smul.f32 %s343, %s345
    %v347 = vstv %s346
    %v348 = vmul.f32 %v64, %v347
    %v349 = vmul.f32 %v65, %v347
    %v350 = vmul.f32 %v66, %v347
    %v351 = vmul.f32 %v67, %v347
    %v352 = vmul.f32 %v68, %v347
    %v353 = vadd.f32 %v316, %v348
    %v354 = vadd.f32 %v317, %v349
    %v355 = vadd.f32 %v318, %v350
    %v356 = vadd.f32 %v319, %v351
    %v357 = vadd.f32 %v320, %v352
    %v358 = vadd.f32 %v353, 1e-05
    %v359 = vadd.f32 %v354, 1e-05
    %v360 = vadd.f32 %v355, 1e-05
    %v361 = vadd.f32 %v356, 1e-05
    %v362 = vadd.f32 %v357, 1e-05
    %v363 = vrsqrt.pop %v358
    %v364 = vrsqrt.pop %v359
    %v365 = vrsqrt.pop %v360
    %v366 = vrsqrt.pop %v361
    %v367 = vrsqrt.pop %v362
    %v368 = vmul.f32 %v274, %v363
    %v369 = vmul.f32 %v275, %v364
    %v370 = vmul.f32 %v276, %v365
    %v371 = vmul.f32 %v277, %v366
    %v372 = vmul.f32 %v278, %v367
    %v373 = vmul.f32 %v368, %v188
    %v374 = vmul.f32 %v369, %v189
    %v375 = vmul.f32 %v370, %v190
    %v376 = vmul.f32 %v371, %v191
    %v377 = vmul.f32 %v372, %v192
    %v378 = vadd.f32 %v373, %v193
    %v379 = vadd.f32 %v374, %v194
    %v380 = vadd.f32 %v375, %v195
    %v381 = vadd.f32 %v376, %v196
    %v382 = vadd.f32 %v377, %v197
    %v383 = vld [vmem:[%s1 + $0x108] sm:$0xff]
    %v384 = vld [vmem:[%s1 + $0x110] sm:$0xff]
    %v385 = vld [vmem:[%s1 + $0x118] sm:$0xff]
    %v386 = vld [vmem:[%s1 + $0x120] sm:$0xff]
    %v387 = vpack.c.bf16 %v379, %v378
    %v388 = vpack.c.bf16 %v381, %v380
    %v389 = vpack.c.bf16 %v382, %v382
    %v390 = vpack.c.bf16 %v384, %v383
    %v391 = vpack.c.bf16 %v386, %v385
    %v392 = vld [vmem:[%s1 + $0x128] sm:$0x1]
    %v393 = vlaneseq
    %v394 = vshrl.u32 %v393, 7
    %v395 = vsub.s32 0, %v394
    %v396 = vrot.slane %v392, %v395
    %v398 = vsel %vm203, %v387, 0
    %v401 = vsel %vm203, %v388, 0
    %v404 = vsel %vm203, %v389, 0
    %406 = vmatprep.subr.bf16.mxu0 0
    %407 = vmatpush1.bf16.msra.mxu0 %v390
    %408 = vmatprep.subr.bf16.mxu0 0
    %409 = vmatpush1.bf16.msra.mxu0 %v391
    %410 = vmatprep.subr.bf16.mxu0 0
    %411 = vmatpush1.bf16.msra.mxu0 0
    %412 = vmatprep.subr.bf16.mxu0 0
    %413 = vmatpush1.bf16.msra.mxu0 0
    %414 = vmatprep.subr.bf16.mxu0 0
    %415 = vmatpush1.bf16.msra.mxu0 0
    %416 = vmatprep.subr.bf16.mxu0 0
    %417 = vmatpush1.bf16.msra.mxu0 0
    %418 = vmatprep.subr.bf16.mxu0 0
    %419 = vmatpush1.bf16.msra.mxu0 0
    %420 = vmatprep.subr.bf16.mxu0 0
    %421 = vmatpush1.bf16.msra.mxu0 0
    %422 = vmatprep.subr.bf16.mxu0 0
    %423 = vmatpush1.bf16.msra.mxu0 0
    %424 = vmatprep.subr.bf16.mxu0 0
    %425 = vmatpush1.bf16.msra.mxu0 0
    %426 = vmatprep.subr.bf16.mxu0 0
    %427 = vmatpush1.bf16.msra.mxu0 0
    %428 = vmatprep.subr.bf16.mxu0 0
    %429 = vmatpush1.bf16.msra.mxu0 0
    %430 = vmatprep.subr.bf16.mxu0 0
    %431 = vmatpush1.bf16.msra.mxu0 0
    %432 = vmatprep.subr.bf16.mxu0 0
    %433 = vmatpush1.bf16.msra.mxu0 0
    %434 = vmatprep.subr.bf16.mxu0 0
    %435 = vmatpush1.bf16.msra.mxu0 0
    %436 = vmatprep.subr.bf16.mxu0 0
    %437 = vmatpush1.bf16.msra.mxu0 0
    %438 = vmatprep.mubr.bf16.mxu0 0
    %439 = vmatmul.mubr.bf16.gmra.mrb[0].mxu0 %v398
    %v440 = vpop.f32.mrb[0].mxu0
    %v441 = vadd.f32 %v396, %v440
    %v442 = vpop.f32.mrb[0].mxu0
    %v443 = vpop.f32.mrb[0].mxu0
    %v444 = vadd.f32 %v396, %v443
    %v445 = vpop.f32.mrb[0].mxu0
    %446 = vmatprep.mubr.bf16.mxu0 0
    %447 = vmatmul.mubr.bf16.gmra.mrb[0].mxu0 %v401
    %v448 = vpop.f32.mrb[0].mxu0
    %v449 = vadd.f32 %v396, %v448
    %v450 = vpop.f32.mrb[0].mxu0
    %v451 = vpop.f32.mrb[0].mxu0
    %v452 = vadd.f32 %v396, %v451
    %v453 = vpop.f32.mrb[0].mxu0
    %454 = vmatprep.mubr.bf16.mxu0 0
    %455 = vmatmul.mubr.bf16.gmra.mrb[0].mxu0 %v404
    %v456 = vpop.f32.mrb[0].mxu0
    %v457 = vadd.f32 %v396, %v456
    %v458 = vpop.f32.mrb[0].mxu0
    %v459 = vpop.f32.mrb[0].mxu0
    %v460 = vpop.f32.mrb[0].mxu0
    %461 = vdwg.mxu0
    %v462 = vpack.c.bf16 %v444, %v441
    %v463 = vpack.c.bf16 %v452, %v449
    %v464 = vpack.c.bf16 %v457, %v457
    %468 = vrot.lane.b32.xlu0 %v462, 96
    %v469 = vpop.permute.xlu0 %468
    %470 = vrot.lane.b32.xlu0 %v463, 96
    %v471 = vpop.permute.xlu0 %470
    %472 = vrot.lane.b32.xlu0 %v464, 96
    %v473 = vpop.permute.xlu0 %472
    %vm474 = vcmask 130048
    %v476 = vsel %vm474, %v462, 0
    %v479 = vsel %vm474, %v463, 0
    %v482 = vsel %vm474, %v464, 0
    %v485 = vsel %vm474, %v469, 0
    %v488 = vsel %vm474, %v471, 0
    %v491 = vsel %vm474, %v473, 0
    %493 = vmatprep.subr.bf16.mxu0 0
    %494 = vmatpush1.bf16.xpose.msra.mxu0 %v485
    %495 = vmatprep.subr.bf16.mxu0 0
    %496 = vmatpush1.bf16.xpose.msra.mxu0 %v488
    %497 = vmatprep.subr.bf16.mxu0 0
    %498 = vmatpush1.bf16.xpose.msra.mxu0 %v491
    %499 = vmatprep.subr.bf16.mxu0 0
    %500 = vmatpush1.bf16.xpose.msra.mxu0 0
    %501 = vmatprep.subr.bf16.mxu0 0
    %502 = vmatpush1.bf16.xpose.msra.mxu0 0
    %503 = vmatprep.subr.bf16.mxu0 0
    %504 = vmatpush1.bf16.xpose.msra.mxu0 0
    %505 = vmatprep.subr.bf16.mxu0 0
    %506 = vmatpush1.bf16.xpose.msra.mxu0 0
    %507 = vmatprep.subr.bf16.mxu0 0
    %508 = vmatpush1.bf16.xpose.msra.mxu0 0
    %509 = vmatprep.subr.bf16.mxu0 0
    %510 = vmatpush1.bf16.xpose.msra.mxu0 0
    %511 = vmatprep.subr.bf16.mxu0 0
    %512 = vmatpush1.bf16.xpose.msra.mxu0 0
    %513 = vmatprep.subr.bf16.mxu0 0
    %514 = vmatpush1.bf16.xpose.msra.mxu0 0
    %515 = vmatprep.subr.bf16.mxu0 0
    %516 = vmatpush1.bf16.xpose.msra.mxu0 0
    %517 = vmatprep.subr.bf16.mxu0 0
    %518 = vmatpush1.bf16.xpose.msra.mxu0 0
    %519 = vmatprep.subr.bf16.mxu0 0
    %520 = vmatpush1.bf16.xpose.msra.mxu0 0
    %521 = vmatprep.subr.bf16.mxu0 0
    %522 = vmatpush1.bf16.xpose.msra.mxu0 0
    %523 = vmatprep.subr.bf16.mxu0 0
    %524 = vmatpush1.bf16.xpose.msra.mxu0 0
    %525 = vmatprep.mubr.bf16.mxu0 0
    %526 = vmatmul.mubr.bf16.gmra.mrb[0].mxu0 %v476
    %v527 = vpop.f32.mrb[0].mxu0
    %v528 = vadd.f32 0.0, %v527
    %v529 = vpop.f32.mrb[0].mxu0
    %v530 = vpop.f32.mrb[0].mxu0
    %v531 = vadd.f32 0.0, %v530
    %v532 = vpop.f32.mrb[0].mxu0
    %533 = vmatprep.mubr.bf16.mxu0 0
    %534 = vmatmul.mubr.bf16.gmra.mrb[0].mxu0 %v479
    %v535 = vpop.f32.mrb[0].mxu0
    %v536 = vadd.f32 0.0, %v535
    %v537 = vpop.f32.mrb[0].mxu0
    %v538 = vpop.f32.mrb[0].mxu0
    %v539 = vadd.f32 0.0, %v538
    %v540 = vpop.f32.mrb[0].mxu0
    %541 = vmatprep.mubr.bf16.mxu0 0
    %542 = vmatmul.mubr.bf16.gmra.mrb[0].mxu0 %v482
    %v543 = vpop.f32.mrb[0].mxu0
    %v544 = vadd.f32 0.0, %v543
    %v545 = vpop.f32.mrb[0].mxu0
    %v546 = vpop.f32.mrb[0].mxu0
    %v547 = vpop.f32.mrb[0].mxu0
    %548 = vdwg.mxu0
    %v549 = vmul.f32 %v528, 0.25
    %v550 = vmul.f32 %v531, 0.25
    %v551 = vmul.f32 %v536, 0.25
    %v552 = vmul.f32 %v539, 0.25
    %v553 = vmul.f32 %v544, 0.25
    %v554 = vadd.f32 %v549, %v92
    %v555 = vadd.f32 %v550, %v93
    %v556 = vadd.f32 %v551, %v94
    %v557 = vadd.f32 %v552, %v95
    %v558 = vadd.f32 %v553, %v96
    %v559 = vmul.f32 %v554, 1.442695
    %v560 = vpow.pop %v559
    %v561 = vmul.f32 %v555, 1.442695
    %v562 = vpow.pop %v561
    %v563 = vmul.f32 %v556, 1.442695
    %v564 = vpow.pop %v563
    %v565 = vmul.f32 %v557, 1.442695
    %v566 = vpow.pop %v565
    %v567 = vmul.f32 %v558, 1.442695
    %v568 = vpow.pop %v567
    %vm569 = vcmask 277504
    %v570 = vsel %vm569, %v560, 0.0
    %571 = vadd.xlane.f32.xlu0 %v570
    %v572 = vpop.xlane.xlu0 %571
    %v573 = vsel %vm569, %v562, 0.0
    %574 = vadd.xlane.f32.xlu0 %v573
    %v575 = vpop.xlane.xlu0 %574
    %v576 = vsel %vm569, %v564, 0.0
    %577 = vadd.xlane.f32.xlu0 %v576
    %v578 = vpop.xlane.xlu0 %577
    %v579 = vsel %vm569, %v566, 0.0
    %580 = vadd.xlane.f32.xlu0 %v579
    %v581 = vpop.xlane.xlu0 %580
    %vm582 = vcmask 271360
    %v583 = vsel %vm582, %v568, 0.0
    %584 = vadd.xlane.f32.xlu0 %v583
    %v585 = vpop.xlane.xlu0 %584
    %v586 = vrcp.pop %v572
    %v587 = vrcp.pop %v575
    %v588 = vrcp.pop %v578
    %v589 = vrcp.pop %v581
    %v590 = vrcp.pop %v585
    %v591 = vmul.f32 %v560, %v586
    %v592 = vmul.f32 %v562, %v587
    %v593 = vmul.f32 %v564, %v588
    %v594 = vmul.f32 %v566, %v589
    %v595 = vmul.f32 %v568, %v590
    %v596 = vpack.c.bf16 %v592, %v591
    %v597 = vpack.c.bf16 %v594, %v593
    %v598 = vpack.c.bf16 %v595, %v595
    %599 = vrot.lane.b32.xlu0 %v462, 64
    %v600 = vpop.permute.xlu0 %599
    %601 = vrot.lane.b32.xlu0 %v463, 64
    %v602 = vpop.permute.xlu0 %601
    %603 = vrot.lane.b32.xlu0 %v464, 64
    %v604 = vpop.permute.xlu0 %603
    %v608 = vsel %vm569, %v596, 0
    %v611 = vsel %vm569, %v597, 0
    %v614 = vsel %vm569, %v598, 0
    %vm616 = vcmask 1040384
    %v618 = vsel %vm616, %v604, 0
    %620 = vmatprep.subr.bf16.mxu0 0
    %621 = vmatpush1.bf16.msra.mxu0 %v600
    %622 = vmatprep.subr.bf16.mxu0 0
    %623 = vmatpush1.bf16.msra.mxu0 %v602
    %624 = vmatprep.subr.bf16.mxu0 0
    %625 = vmatpush1.bf16.msra.mxu0 %v618
    %626 = vmatprep.subr.bf16.mxu0 0
    %627 = vmatpush1.bf16.msra.mxu0 0
    %628 = vmatprep.subr.bf16.mxu0 0
    %629 = vmatpush1.bf16.msra.mxu0 0
    %630 = vmatprep.subr.bf16.mxu0 0
    %631 = vmatpush1.bf16.msra.mxu0 0
    %632 = vmatprep.subr.bf16.mxu0 0
    %633 = vmatpush1.bf16.msra.mxu0 0
    %634 = vmatprep.subr.bf16.mxu0 0
    %635 = vmatpush1.bf16.msra.mxu0 0
    %636 = vmatprep.subr.bf16.mxu0 0
    %637 = vmatpush1.bf16.msra.mxu0 0
    %638 = vmatprep.subr.bf16.mxu0 0
    %639 = vmatpush1.bf16.msra.mxu0 0
    %640 = vmatprep.subr.bf16.mxu0 0
    %641 = vmatpush1.bf16.msra.mxu0 0
    %642 = vmatprep.subr.bf16.mxu0 0
    %643 = vmatpush1.bf16.msra.mxu0 0
    %644 = vmatprep.subr.bf16.mxu0 0
    %645 = vmatpush1.bf16.msra.mxu0 0
    %646 = vmatprep.subr.bf16.mxu0 0
    %647 = vmatpush1.bf16.msra.mxu0 0
    %648 = vmatprep.subr.bf16.mxu0 0
    %649 = vmatpush1.bf16.msra.mxu0 0
    %650 = vmatprep.subr.bf16.mxu0 0
    %651 = vmatpush1.bf16.msra.mxu0 0
    %652 = vmatprep.mubr.bf16.mxu0 0
    %653 = vmatmul.mubr.bf16.gmra.mrb[0].mxu0 %v608
    %v654 = vpop.f32.mrb[0].mxu0
    %v655 = vadd.f32 0.0, %v654
    %v656 = vpop.f32.mrb[0].mxu0
    %v657 = vpop.f32.mrb[0].mxu0
    %v658 = vadd.f32 0.0, %v657
    %v659 = vpop.f32.mrb[0].mxu0
    %660 = vmatprep.mubr.bf16.mxu0 0
    %661 = vmatmul.mubr.bf16.gmra.mrb[0].mxu0 %v611
    %v662 = vpop.f32.mrb[0].mxu0
    %v663 = vadd.f32 0.0, %v662
    %v664 = vpop.f32.mrb[0].mxu0
    %v665 = vpop.f32.mrb[0].mxu0
    %v666 = vadd.f32 0.0, %v665
    %v667 = vpop.f32.mrb[0].mxu0
    %668 = vmatprep.mubr.bf16.mxu0 0
    %669 = vmatmul.mubr.bf16.gmra.mrb[0].mxu0 %v614
    %v670 = vpop.f32.mrb[0].mxu0
    %v671 = vadd.f32 0.0, %v670
    %v672 = vpop.f32.mrb[0].mxu0
    %v673 = vpop.f32.mrb[0].mxu0
    %v674 = vpop.f32.mrb[0].mxu0
    %675 = vdwg.mxu0
    %676 = vrot.lane.b32.xlu0 %v462, 112
    %v677 = vpop.permute.xlu0 %676
    %678 = vrot.lane.b32.xlu0 %v463, 112
    %v679 = vpop.permute.xlu0 %678
    %680 = vrot.lane.b32.xlu0 %v464, 112
    %v681 = vpop.permute.xlu0 %680
    %682 = vrot.lane.b32.xlu0 %v462, 80
    %v683 = vpop.permute.xlu0 %682
    %684 = vrot.lane.b32.xlu0 %v463, 80
    %v685 = vpop.permute.xlu0 %684
    %686 = vrot.lane.b32.xlu0 %v464, 80
    %v687 = vpop.permute.xlu0 %686
    %v689 = vsel %vm474, %v677, 0
    %v692 = vsel %vm474, %v679, 0
    %v695 = vsel %vm474, %v681, 0
    %v698 = vsel %vm474, %v683, 0
    %v701 = vsel %vm474, %v685, 0
    %v704 = vsel %vm474, %v687, 0
    %706 = vmatprep.subr.bf16.mxu0 0
    %707 = vmatpush1.bf16.xpose.msra.mxu0 %v698
    %708 = vmatprep.subr.bf16.mxu0 0
    %709 = vmatpush1.bf16.xpose.msra.mxu0 %v701
    %710 = vmatprep.subr.bf16.mxu0 0
    %711 = vmatpush1.bf16.xpose.msra.mxu0 %v704
    %712 = vmatprep.subr.bf16.mxu0 0
    %713 = vmatpush1.bf16.xpose.msra.mxu0 0
    %714 = vmatprep.subr.bf16.mxu0 0
    %715 = vmatpush1.bf16.xpose.msra.mxu0 0
    %716 = vmatprep.subr.bf16.mxu0 0
    %717 = vmatpush1.bf16.xpose.msra.mxu0 0
    %718 = vmatprep.subr.bf16.mxu0 0
    %719 = vmatpush1.bf16.xpose.msra.mxu0 0
    %720 = vmatprep.subr.bf16.mxu0 0
    %721 = vmatpush1.bf16.xpose.msra.mxu0 0
    %722 = vmatprep.subr.bf16.mxu0 0
    %723 = vmatpush1.bf16.xpose.msra.mxu0 0
    %724 = vmatprep.subr.bf16.mxu0 0
    %725 = vmatpush1.bf16.xpose.msra.mxu0 0
    %726 = vmatprep.subr.bf16.mxu0 0
    %727 = vmatpush1.bf16.xpose.msra.mxu0 0
    %728 = vmatprep.subr.bf16.mxu0 0
    %729 = vmatpush1.bf16.xpose.msra.mxu0 0
    %730 = vmatprep.subr.bf16.mxu0 0
    %731 = vmatpush1.bf16.xpose.msra.mxu0 0
    %732 = vmatprep.subr.bf16.mxu0 0
    %733 = vmatpush1.bf16.xpose.msra.mxu0 0
    %734 = vmatprep.subr.bf16.mxu0 0
    %735 = vmatpush1.bf16.xpose.msra.mxu0 0
    %736 = vmatprep.subr.bf16.mxu0 0
    %737 = vmatpush1.bf16.xpose.msra.mxu0 0
    %738 = vmatprep.mubr.bf16.mxu0 0
    %739 = vmatmul.mubr.bf16.gmra.mrb[0].mxu0 %v689
    %v740 = vpop.f32.mrb[0].mxu0
    %v741 = vadd.f32 0.0, %v740
    %v742 = vpop.f32.mrb[0].mxu0
    %v743 = vpop.f32.mrb[0].mxu0
    %v744 = vadd.f32 0.0, %v743
    %v745 = vpop.f32.mrb[0].mxu0
    %746 = vmatprep.mubr.bf16.mxu0 0
    %747 = vmatmul.mubr.bf16.gmra.mrb[0].mxu0 %v692
    %v748 = vpop.f32.mrb[0].mxu0
    %v749 = vadd.f32 0.0, %v748
    %v750 = vpop.f32.mrb[0].mxu0
    %v751 = vpop.f32.mrb[0].mxu0
    %v752 = vadd.f32 0.0, %v751
    %v753 = vpop.f32.mrb[0].mxu0
    %754 = vmatprep.mubr.bf16.mxu0 0
    %755 = vmatmul.mubr.bf16.gmra.mrb[0].mxu0 %v695
    %v756 = vpop.f32.mrb[0].mxu0
    %v757 = vadd.f32 0.0, %v756
    %v758 = vpop.f32.mrb[0].mxu0
    %v759 = vpop.f32.mrb[0].mxu0
    %v760 = vpop.f32.mrb[0].mxu0
    %761 = vdwg.mxu0
    %v762 = vmul.f32 %v741, 0.25
    %v763 = vmul.f32 %v744, 0.25
    %v764 = vmul.f32 %v749, 0.25
    %v765 = vmul.f32 %v752, 0.25
    %v766 = vmul.f32 %v757, 0.25
    %v767 = vadd.f32 %v762, %v92
    %v768 = vadd.f32 %v763, %v93
    %v769 = vadd.f32 %v764, %v94
    %v770 = vadd.f32 %v765, %v95
    %v771 = vadd.f32 %v766, %v96
    %v772 = vmul.f32 %v767, 1.442695
    %v773 = vpow.pop %v772
    %v774 = vmul.f32 %v768, 1.442695
    %v775 = vpow.pop %v774
    %v776 = vmul.f32 %v769, 1.442695
    %v777 = vpow.pop %v776
    %v778 = vmul.f32 %v770, 1.442695
    %v779 = vpow.pop %v778
    %v780 = vmul.f32 %v771, 1.442695
    %v781 = vpow.pop %v780
    %v782 = vsel %vm569, %v773, 0.0
    %783 = vadd.xlane.f32.xlu0 %v782
    %v784 = vpop.xlane.xlu0 %783
    %v785 = vsel %vm569, %v775, 0.0
    %786 = vadd.xlane.f32.xlu0 %v785
    %v787 = vpop.xlane.xlu0 %786
    %v788 = vsel %vm569, %v777, 0.0
    %789 = vadd.xlane.f32.xlu0 %v788
    %v790 = vpop.xlane.xlu0 %789
    %v791 = vsel %vm569, %v779, 0.0
    %792 = vadd.xlane.f32.xlu0 %v791
    %v793 = vpop.xlane.xlu0 %792
    %v794 = vsel %vm582, %v781, 0.0
    %795 = vadd.xlane.f32.xlu0 %v794
    %v796 = vpop.xlane.xlu0 %795
    %v797 = vrcp.pop %v784
    %v798 = vrcp.pop %v787
    %v799 = vrcp.pop %v790
    %v800 = vrcp.pop %v793
    %v801 = vrcp.pop %v796
    %v802 = vmul.f32 %v773, %v797
    %v803 = vmul.f32 %v775, %v798
    %v804 = vmul.f32 %v777, %v799
    %v805 = vmul.f32 %v779, %v800
    %v806 = vmul.f32 %v781, %v801
    %v807 = vpack.c.bf16 %v803, %v802
    %v808 = vpack.c.bf16 %v805, %v804
    %v809 = vpack.c.bf16 %v806, %v806
    %810 = vrot.lane.b32.xlu0 %v462, 48
    %v811 = vpop.permute.xlu0 %810
    %812 = vrot.lane.b32.xlu0 %v463, 48
    %v813 = vpop.permute.xlu0 %812
    %814 = vrot.lane.b32.xlu0 %v464, 48
    %v815 = vpop.permute.xlu0 %814
    %v819 = vsel %vm569, %v807, 0
    %v822 = vsel %vm569, %v808, 0
    %v825 = vsel %vm569, %v809, 0
    %v828 = vsel %vm616, %v815, 0
    %830 = vmatprep.subr.bf16.mxu0 0
    %831 = vmatpush1.bf16.msra.mxu0 %v811
    %832 = vmatprep.subr.bf16.mxu0 0
    %833 = vmatpush1.bf16.msra.mxu0 %v813
    %834 = vmatprep.subr.bf16.mxu0 0
    %835 = vmatpush1.bf16.msra.mxu0 %v828
    %836 = vmatprep.subr.bf16.mxu0 0
    %837 = vmatpush1.bf16.msra.mxu0 0
    %838 = vmatprep.subr.bf16.mxu0 0
    %839 = vmatpush1.bf16.msra.mxu0 0
    %840 = vmatprep.subr.bf16.mxu0 0
    %841 = vmatpush1.bf16.msra.mxu0 0
    %842 = vmatprep.subr.bf16.mxu0 0
    %843 = vmatpush1.bf16.msra.mxu0 0
    %844 = vmatprep.subr.bf16.mxu0 0
    %845 = vmatpush1.bf16.msra.mxu0 0
    %846 = vmatprep.subr.bf16.mxu0 0
    %847 = vmatpush1.bf16.msra.mxu0 0
    %848 = vmatprep.subr.bf16.mxu0 0
    %849 = vmatpush1.bf16.msra.mxu0 0
    %850 = vmatprep.subr.bf16.mxu0 0
    %851 = vmatpush1.bf16.msra.mxu0 0
    %852 = vmatprep.subr.bf16.mxu0 0
    %853 = vmatpush1.bf16.msra.mxu0 0
    %854 = vmatprep.subr.bf16.mxu0 0
    %855 = vmatpush1.bf16.msra.mxu0 0
    %856 = vmatprep.subr.bf16.mxu0 0
    %857 = vmatpush1.bf16.msra.mxu0 0
    %858 = vmatprep.subr.bf16.mxu0 0
    %859 = vmatpush1.bf16.msra.mxu0 0
    %860 = vmatprep.subr.bf16.mxu0 0
    %861 = vmatpush1.bf16.msra.mxu0 0
    %862 = vmatprep.mubr.bf16.mxu0 0
    %863 = vmatmul.mubr.bf16.gmra.mrb[0].mxu0 %v819
    %v864 = vpop.f32.mrb[0].mxu0
    %v865 = vadd.f32 0.0, %v864
    %v866 = vpop.f32.mrb[0].mxu0
    %v867 = vpop.f32.mrb[0].mxu0
    %v868 = vadd.f32 0.0, %v867
    %v869 = vpop.f32.mrb[0].mxu0
    %870 = vmatprep.mubr.bf16.mxu0 0
    %871 = vmatmul.mubr.bf16.gmra.mrb[0].mxu0 %v822
    %v872 = vpop.f32.mrb[0].mxu0
    %v873 = vadd.f32 0.0, %v872
    %v874 = vpop.f32.mrb[0].mxu0
    %v875 = vpop.f32.mrb[0].mxu0
    %v876 = vadd.f32 0.0, %v875
    %v877 = vpop.f32.mrb[0].mxu0
    %878 = vmatprep.mubr.bf16.mxu0 0
    %879 = vmatmul.mubr.bf16.gmra.mrb[0].mxu0 %v825
    %v880 = vpop.f32.mrb[0].mxu0
    %v881 = vadd.f32 0.0, %v880
    %v882 = vpop.f32.mrb[0].mxu0
    %v883 = vpop.f32.mrb[0].mxu0
    %v884 = vpop.f32.mrb[0].mxu0
    %885 = vdwg.mxu0
    %891 = vrot.lane.b32.xlu0 %v865, 16
    %v892 = vpop.permute.xlu0 %891
    %893 = vrot.lane.b32.xlu0 %v868, 16
    %v894 = vpop.permute.xlu0 %893
    %895 = vrot.lane.b32.xlu0 %v873, 16
    %v896 = vpop.permute.xlu0 %895
    %897 = vrot.lane.b32.xlu0 %v876, 16
    %v898 = vpop.permute.xlu0 %897
    %899 = vrot.lane.b32.xlu0 %v881, 16
    %v900 = vpop.permute.xlu0 %899
    %v906 = vsel %vm474, %v655, %v892
    %v907 = vsel %vm474, %v658, %v894
    %v908 = vsel %vm474, %v663, %v896
    %v909 = vsel %vm474, %v666, %v898
    %v910 = vsel %vm474, %v671, %v900
    %v911 = vadd.f32 %v167, %v906
    %v912 = vadd.f32 %v170, %v907
    %v913 = vadd.f32 %v175, %v908
    %v914 = vadd.f32 %v178, %v909
    %v915 = vadd.f32 %v183, %v910
    %v916 = vld [vmem:[%s1 + $0xb8] sm:$0xff]
    %v917 = vld [vmem:[%s1 + $0xc0] sm:$0xff]
    %v918 = vld [vmem:[%s1 + $0xc8] sm:$0xff]
    %v919 = vld [vmem:[%s1 + $0xd0] sm:$0xff]
    %v920 = vld [vmem:[%s1 + $0xd8] sm:$0x3]
    %v921 = vld [vmem:[%s1 + $0xe0] sm:$0xff]
    %v922 = vld [vmem:[%s1 + $0xe8] sm:$0xff]
    %v923 = vld [vmem:[%s1 + $0xf0] sm:$0xff]
    %v924 = vld [vmem:[%s1 + $0xf8] sm:$0xff]
    %v925 = vld [vmem:[%s1 + $0x100] sm:$0x3]
    %v926 = vmul.f32 %v911, %v39
    %v927 = vmul.f32 %v912, %v40
    %v928 = vmul.f32 %v913, %v41
    %v929 = vmul.f32 %v914, %v42
    %v930 = vmul.f32 %v915, %v43
    %v931 = vsel %vm203, %v926, 0.0
    %v932 = vsel %vm203, %v927, 0.0
    %v933 = vadd.f32 %v931, %v932
    %v934 = vsel %vm203, %v928, 0.0
    %v935 = vadd.f32 %v933, %v934
    %v936 = vsel %vm203, %v929, 0.0
    %v937 = vadd.f32 %v935, %v936
    %v938 = vsel %vm211, %v930, 0.0
    %v939 = vadd.f32 %v937, %v938
    %940 = vadd.xlane.f32.xlu0 %v939
    %v941 = vpop.xlane.xlu0 %940
    %v942 = vrot.slane %v941, 4
    %v943 = vadd.f32 %v941, %v942
    %v944 = vrot.slane %v943, 2
    %v945 = vadd.f32 %v943, %v944
    %v946 = vrot.slane %v945, 1
    %v947 = vadd.f32 %v945, %v946
    %s948 = vtos %v947
    %v949 = vrcp.pop 544.0
    %s950 = vtos %v949
    %s951 = smul.f32 %s948, %s950
    %v952 = vstv %s951
    %v953 = vmul.f32 %v39, %v952
    %v954 = vmul.f32 %v40, %v952
    %v955 = vmul.f32 %v41, %v952
    %v956 = vmul.f32 %v42, %v952
    %v957 = vmul.f32 %v43, %v952
    %v958 = vadd.f32 %v953, 0.0
    %v959 = vadd.f32 %v954, 0.0
    %v960 = vadd.f32 %v955, 0.0
    %v961 = vadd.f32 %v956, 0.0
    %v962 = vadd.f32 %v957, 0.0
    %v963 = vmul.f32 %v911, %v64
    %v964 = vmul.f32 %v912, %v65
    %v965 = vmul.f32 %v913, %v66
    %v966 = vmul.f32 %v914, %v67
    %v967 = vmul.f32 %v915, %v68
    %v968 = vsel %vm203, %v963, 0.0
    %v969 = vsel %vm203, %v964, 0.0
    %v970 = vadd.f32 %v968, %v969
    %v971 = vsel %vm203, %v965, 0.0
    %v972 = vadd.f32 %v970, %v971
    %v973 = vsel %vm203, %v966, 0.0
    %v974 = vadd.f32 %v972, %v973
    %v975 = vsel %vm211, %v967, 0.0
    %v976 = vadd.f32 %v974, %v975
    %977 = vadd.xlane.f32.xlu0 %v976
    %v978 = vpop.xlane.xlu0 %977
    %v979 = vrot.slane %v978, 4
    %v980 = vadd.f32 %v978, %v979
    %v981 = vrot.slane %v980, 2
    %v982 = vadd.f32 %v980, %v981
    %v983 = vrot.slane %v982, 1
    %v984 = vadd.f32 %v982, %v983
    %s985 = vtos %v984
    %v986 = vrcp.pop 544.0
    %s987 = vtos %v986
    %s988 = smul.f32 %s985, %s987
    %v989 = vstv %s988
    %v990 = vmul.f32 %v64, %v989
    %v991 = vmul.f32 %v65, %v989
    %v992 = vmul.f32 %v66, %v989
    %v993 = vmul.f32 %v67, %v989
    %v994 = vmul.f32 %v68, %v989
    %v995 = vadd.f32 %v958, %v990
    %v996 = vadd.f32 %v959, %v991
    %v997 = vadd.f32 %v960, %v992
    %v998 = vadd.f32 %v961, %v993
    %v999 = vadd.f32 %v962, %v994
    %v1000 = vsub.f32 %v911, %v995
    %v1001 = vsub.f32 %v912, %v996
    %v1002 = vsub.f32 %v913, %v997
    %v1003 = vsub.f32 %v914, %v998
    %v1004 = vsub.f32 %v915, %v999
    %v1005 = vmul.f32 %v1000, %v1000
    %v1006 = vmul.f32 %v1001, %v1001
    %v1007 = vmul.f32 %v1002, %v1002
    %v1008 = vmul.f32 %v1003, %v1003
    %v1009 = vmul.f32 %v1004, %v1004
    %v1010 = vmul.f32 %v1005, %v39
    %v1011 = vmul.f32 %v1006, %v40
    %v1012 = vmul.f32 %v1007, %v41
    %v1013 = vmul.f32 %v1008, %v42
    %v1014 = vmul.f32 %v1009, %v43
    %v1015 = vsel %vm203, %v1010, 0.0
    %v1016 = vsel %vm203, %v1011, 0.0
    %v1017 = vadd.f32 %v1015, %v1016
    %v1018 = vsel %vm203, %v1012, 0.0
    %v1019 = vadd.f32 %v1017, %v1018
    %v1020 = vsel %vm203, %v1013, 0.0
    %v1021 = vadd.f32 %v1019, %v1020
    %v1022 = vsel %vm211, %v1014, 0.0
    %v1023 = vadd.f32 %v1021, %v1022
    %1024 = vadd.xlane.f32.xlu0 %v1023
    %v1025 = vpop.xlane.xlu0 %1024
    %v1026 = vrot.slane %v1025, 4
    %v1027 = vadd.f32 %v1025, %v1026
    %v1028 = vrot.slane %v1027, 2
    %v1029 = vadd.f32 %v1027, %v1028
    %v1030 = vrot.slane %v1029, 1
    %v1031 = vadd.f32 %v1029, %v1030
    %s1032 = vtos %v1031
    %v1033 = vrcp.pop 544.0
    %s1034 = vtos %v1033
    %s1035 = smul.f32 %s1032, %s1034
    %v1036 = vstv %s1035
    %v1037 = vmul.f32 %v39, %v1036
    %v1038 = vmul.f32 %v40, %v1036
    %v1039 = vmul.f32 %v41, %v1036
    %v1040 = vmul.f32 %v42, %v1036
    %v1041 = vmul.f32 %v43, %v1036
    %v1042 = vadd.f32 %v1037, 0.0
    %v1043 = vadd.f32 %v1038, 0.0
    %v1044 = vadd.f32 %v1039, 0.0
    %v1045 = vadd.f32 %v1040, 0.0
    %v1046 = vadd.f32 %v1041, 0.0
    %v1047 = vmul.f32 %v1005, %v64
    %v1048 = vmul.f32 %v1006, %v65
    %v1049 = vmul.f32 %v1007, %v66
    %v1050 = vmul.f32 %v1008, %v67
    %v1051 = vmul.f32 %v1009, %v68
    %v1052 = vsel %vm203, %v1047, 0.0
    %v1053 = vsel %vm203, %v1048, 0.0
    %v1054 = vadd.f32 %v1052, %v1053
    %v1055 = vsel %vm203, %v1049, 0.0
    %v1056 = vadd.f32 %v1054, %v1055
    %v1057 = vsel %vm203, %v1050, 0.0
    %v1058 = vadd.f32 %v1056, %v1057
    %v1059 = vsel %vm211, %v1051, 0.0
    %v1060 = vadd.f32 %v1058, %v1059
    %1061 = vadd.xlane.f32.xlu0 %v1060
    %v1062 = vpop.xlane.xlu0 %1061
    %v1063 = vrot.slane %v1062, 4
    %v1064 = vadd.f32 %v1062, %v1063
    %v1065 = vrot.slane %v1064, 2
    %v1066 = vadd.f32 %v1064, %v1065
    %v1067 = vrot.slane %v1066, 1
    %v1068 = vadd.f32 %v1066, %v1067
    %s1069 = vtos %v1068
    %v1070 = vrcp.pop 544.0
    %s1071 = vtos %v1070
    %s1072 = smul.f32 %s1069, %s1071
    %v1073 = vstv %s1072
    %v1074 = vmul.f32 %v64, %v1073
    %v1075 = vmul.f32 %v65, %v1073
    %v1076 = vmul.f32 %v66, %v1073
    %v1077 = vmul.f32 %v67, %v1073
    %v1078 = vmul.f32 %v68, %v1073
    %v1079 = vadd.f32 %v1042, %v1074
    %v1080 = vadd.f32 %v1043, %v1075
    %v1081 = vadd.f32 %v1044, %v1076
    %v1082 = vadd.f32 %v1045, %v1077
    %v1083 = vadd.f32 %v1046, %v1078
    %v1084 = vadd.f32 %v1079, 1e-05
    %v1085 = vadd.f32 %v1080, 1e-05
    %v1086 = vadd.f32 %v1081, 1e-05
    %v1087 = vadd.f32 %v1082, 1e-05
    %v1088 = vadd.f32 %v1083, 1e-05
    %v1089 = vrsqrt.pop %v1084
    %v1090 = vrsqrt.pop %v1085
    %v1091 = vrsqrt.pop %v1086
    %v1092 = vrsqrt.pop %v1087
    %v1093 = vrsqrt.pop %v1088
    %v1094 = vmul.f32 %v1000, %v1089
    %v1095 = vmul.f32 %v1001, %v1090
    %v1096 = vmul.f32 %v1002, %v1091
    %v1097 = vmul.f32 %v1003, %v1092
    %v1098 = vmul.f32 %v1004, %v1093
    %v1099 = vmul.f32 %v1094, %v916
    %v1100 = vmul.f32 %v1095, %v917
    %v1101 = vmul.f32 %v1096, %v918
    %v1102 = vmul.f32 %v1097, %v919
    %v1103 = vmul.f32 %v1098, %v920
    %v1104 = vadd.f32 %v1099, %v921
    %v1105 = vadd.f32 %v1100, %v922
    %v1106 = vadd.f32 %v1101, %v923
    %v1107 = vadd.f32 %v1102, %v924
    %v1108 = vadd.f32 %v1103, %v925
    %v1109 = vld [vmem:[%s1 + $0x130] sm:$0xff]
    %v1110 = vld [vmem:[%s1 + $0x138] sm:$0xff]
    %v1111 = vld [vmem:[%s1 + $0x140] sm:$0xff]
    %v1112 = vld [vmem:[%s1 + $0x148] sm:$0xff]
    %v1113 = vpack.c.bf16 %v1105, %v1104
    %v1114 = vpack.c.bf16 %v1107, %v1106
    %v1115 = vpack.c.bf16 %v1108, %v1108
    %v1116 = vpack.c.bf16 %v1110, %v1109
    %v1117 = vpack.c.bf16 %v1112, %v1111
    %v1118 = vld [vmem:[%s1 + $0x150] sm:$0x1]
    %v1119 = vlaneseq
    %v1120 = vshrl.u32 %v1119, 7
    %v1121 = vsub.s32 0, %v1120
    %v1122 = vrot.slane %v1118, %v1121
    %v1124 = vsel %vm203, %v1113, 0
    %v1127 = vsel %vm203, %v1114, 0
    %v1130 = vsel %vm203, %v1115, 0
    %1132 = vmatprep.subr.bf16.mxu0 0
    %1133 = vmatpush1.bf16.msra.mxu0 %v1116
    %1134 = vmatprep.subr.bf16.mxu0 0
    %1135 = vmatpush1.bf16.msra.mxu0 %v1117
    %1136 = vmatprep.subr.bf16.mxu0 0
    %1137 = vmatpush1.bf16.msra.mxu0 0
    %1138 = vmatprep.subr.bf16.mxu0 0
    %1139 = vmatpush1.bf16.msra.mxu0 0
    %1140 = vmatprep.subr.bf16.mxu0 0
    %1141 = vmatpush1.bf16.msra.mxu0 0
    %1142 = vmatprep.subr.bf16.mxu0 0
    %1143 = vmatpush1.bf16.msra.mxu0 0
    %1144 = vmatprep.subr.bf16.mxu0 0
    %1145 = vmatpush1.bf16.msra.mxu0 0
    %1146 = vmatprep.subr.bf16.mxu0 0
    %1147 = vmatpush1.bf16.msra.mxu0 0
    %1148 = vmatprep.subr.bf16.mxu0 0
    %1149 = vmatpush1.bf16.msra.mxu0 0
    %1150 = vmatprep.subr.bf16.mxu0 0
    %1151 = vmatpush1.bf16.msra.mxu0 0
    %1152 = vmatprep.subr.bf16.mxu0 0
    %1153 = vmatpush1.bf16.msra.mxu0 0
    %1154 = vmatprep.subr.bf16.mxu0 0
    %1155 = vmatpush1.bf16.msra.mxu0 0
    %1156 = vmatprep.subr.bf16.mxu0 0
    %1157 = vmatpush1.bf16.msra.mxu0 0
    %1158 = vmatprep.subr.bf16.mxu0 0
    %1159 = vmatpush1.bf16.msra.mxu0 0
    %1160 = vmatprep.subr.bf16.mxu0 0
    %1161 = vmatpush1.bf16.msra.mxu0 0
    %1162 = vmatprep.subr.bf16.mxu0 0
    %1163 = vmatpush1.bf16.msra.mxu0 0
    %1164 = vmatprep.mubr.bf16.mxu0 0
    %1165 = vmatmul.mubr.bf16.gmra.mrb[0].mxu0 %v1124
    %v1166 = vpop.f32.mrb[0].mxu0
    %v1167 = vadd.f32 %v1122, %v1166
    %v1168 = vpop.f32.mrb[0].mxu0
    %v1169 = vpop.f32.mrb[0].mxu0
    %v1170 = vpop.f32.mrb[0].mxu0
    %1171 = vmatprep.mubr.bf16.mxu0 0
    %1172 = vmatmul.mubr.bf16.gmra.mrb[0].mxu0 %v1127
    %v1173 = vpop.f32.mrb[0].mxu0
    %v1174 = vadd.f32 %v1122, %v1173
    %v1175 = vpop.f32.mrb[0].mxu0
    %v1176 = vpop.f32.mrb[0].mxu0
    %v1177 = vpop.f32.mrb[0].mxu0
    %1178 = vmatprep.mubr.bf16.mxu0 0
    %1179 = vmatmul.mubr.bf16.gmra.mrb[0].mxu0 %v1130
    %v1180 = vpop.f32.mrb[0].mxu0
    %v1181 = vpop.f32.mrb[0].mxu0
    %v1182 = vpop.f32.mrb[0].mxu0
    %v1183 = vpop.f32.mrb[0].mxu0
    %1184 = vdwg.mxu0
    %v1185 = vmax.f32 %v1167, 0.0
    %v1186 = vmax.f32 %v1174, 0.0
    %v1187 = vadd.f32 %v911, %v1185
    %v1188 = vadd.f32 %v913, %v1186
    %v1189 = vsel %vm616, %v1187, %v1188
    %v1190 = vld [vmem:[%s1 + $0x158] sm:$0xff]
    %v1191 = vld [vmem:[%s1 + $0x160] sm:$0xff]
    %v1192 = vld [vmem:[%s1 + $0x168] sm:$0xff]
    %v1193 = vld [vmem:[%s1 + $0x170] sm:$0xff]
    %v1194 = vpack.c.bf16 %v1189, %v1189
    %v1195 = vpack.c.bf16 %v1191, %v1190
    %v1196 = vpack.c.bf16 %v1193, %v1192
    %v1197 = vld [vmem:[%s1 + $0x178] sm:$0x1]
    %v1198 = vlaneseq
    %v1199 = vshrl.u32 %v1198, 7
    %v1200 = vsub.s32 0, %v1199
    %v1201 = vrot.slane %v1197, %v1200
    %v1203 = vsel %vm203, %v1194, 0
    %1205 = vmatprep.subr.bf16.mxu0 0
    %1206 = vmatpush1.bf16.msra.mxu0 %v1195
    %1207 = vmatprep.subr.bf16.mxu0 0
    %1208 = vmatpush1.bf16.msra.mxu0 %v1196
    %1209 = vmatprep.subr.bf16.mxu0 0
    %1210 = vmatpush1.bf16.msra.mxu0 0
    %1211 = vmatprep.subr.bf16.mxu0 0
    %1212 = vmatpush1.bf16.msra.mxu0 0
    %1213 = vmatprep.subr.bf16.mxu0 0
    %1214 = vmatpush1.bf16.msra.mxu0 0
    %1215 = vmatprep.subr.bf16.mxu0 0
    %1216 = vmatpush1.bf16.msra.mxu0 0
    %1217 = vmatprep.subr.bf16.mxu0 0
    %1218 = vmatpush1.bf16.msra.mxu0 0
    %1219 = vmatprep.subr.bf16.mxu0 0
    %1220 = vmatpush1.bf16.msra.mxu0 0
    %1221 = vmatprep.subr.bf16.mxu0 0
    %1222 = vmatpush1.bf16.msra.mxu0 0
    %1223 = vmatprep.subr.bf16.mxu0 0
    %1224 = vmatpush1.bf16.msra.mxu0 0
    %1225 = vmatprep.subr.bf16.mxu0 0
    %1226 = vmatpush1.bf16.msra.mxu0 0
    %1227 = vmatprep.subr.bf16.mxu0 0
    %1228 = vmatpush1.bf16.msra.mxu0 0
    %1229 = vmatprep.subr.bf16.mxu0 0
    %1230 = vmatpush1.bf16.msra.mxu0 0
    %1231 = vmatprep.subr.bf16.mxu0 0
    %1232 = vmatpush1.bf16.msra.mxu0 0
    %1233 = vmatprep.subr.bf16.mxu0 0
    %1234 = vmatpush1.bf16.msra.mxu0 0
    %1235 = vmatprep.subr.bf16.mxu0 0
    %1236 = vmatpush1.bf16.msra.mxu0 0
    %1237 = vmatprep.mubr.bf16.mxu0 0
    %1238 = vmatmul.mubr.bf16.gmra.mrb[0].mxu0 %v1203
    %v1239 = vpop.f32.mrb[0].mxu0
    %v1240 = vadd.f32 %v1201, %v1239
    %v1241 = vpop.f32.mrb[0].mxu0
    %v1242 = vpop.f32.mrb[0].mxu0
    %v1243 = vpop.f32.mrb[0].mxu0
    %1244 = vdwg.mxu0
    %vm1245 = vcmask 1041408
    %v1246 = vsel %vm1245, %v1240, -inf
    %1247 = vmax.xlane.f32.xlu0 %v1246
    %v1248 = vpop.xlane.xlu0 %1247
    %v1249 = vsub.f32 %v1240, %v1248
    %v1250 = vmul.f32 %v1249, 1.442695
    %v1251 = vpow.pop %v1250
    %v1252 = vsel %vm1245, %v1251, 0.0
    %1253 = vadd.xlane.f32.xlu0 %v1252
    %v1254 = vpop.xlane.xlu0 %1253
    %v1255 = vrcp.pop %v1254
    %v1256 = vmul.f32 %v1251, %v1255
    %1257 = vst [vmem:[#allocation2] sm:$0x3] %v1256
    // Predicated region
    $region10: #{vit_forward.1} parent=1 // pred_check
      _
    $region11: #{vit_forward.1} parent=1 // pred_check_branch
      %1259 = sbr.rel (0) target = $region13
    $region12: #{vit_forward.1} parent=1 // pred_region
      %s1261 = ssub.s32 32, 32
      %1262 = vsyncadd [#allocation3], %s1261
      %s1264 = sshll.u32 [#allocation2], 4
      %s1265 = int_to_ptr.vmem [resolvable:$true] %s1264
      %1267 = dma.vmem_to_hbm [thread:$0]  %s1265, 32, %s2, [#allocation3]
    $region13: #{vit_forward.1} parent=1 // pred_fallthru
      _
    // Predicated region
    $region14: #{vit_forward.1} parent=1 // pred_check
      _
    $region15: #{vit_forward.1} parent=1 // pred_check_branch
      %1269 = sbr.rel (0) target = $region17
    $region16: #{vit_forward.1} parent=1 // pred_region
      %1270 = dma.done [#allocation3], 32
    $region17: #{vit_forward.1} parent=1 // pred_fallthru
      _
    %1271 = vsyncpa [#allocation3], 1

</llo_original>
